<compile_context>
chip_gen: v6e
topology: v6e:2x2x1
jax: 0.10.0
libtpu: 0.0.40
codegen_flags: <defaults>
</compile_context>

<pallas_src>
import jax
import jax.numpy as jnp
from jax import lax
from jax.experimental import pallas as pl
from jax.experimental.pallas import tpu as pltpu


def bottleneck_kernel(x_ref, xh_ref, w1_ref, b1_ref, w2_ref, b2_ref,
                      w3_ref, b3_ref, o_ref, pad_ref, patch_ref):
    # x_ref:  (1, TH, W, Cin) bf16 row tile;  xh_ref: (1, 2, W, Cin) bf16 halo
    # w*_ref: bf16, BN-scale-folded; b*_ref: (1, C) f32 shifts
    # o_ref:  (1, TH, W, Cout) bf16
    # pad_ref:   (TH+2, Wp, P) bf16 — padded conv2 input for this row tile
    # patch_ref: (TH, W, 9P) bf16  — in-place im2col patch
    _, TH, W, Cin = x_ref.shape
    P = w1_ref.shape[1]
    Cout = w3_ref.shape[1]
    i = pl.program_id(1)
    n_row_tiles = pl.num_programs(1)

    x_bf = x_ref[0].reshape(TH * W, Cin)          # bf16 tile rows
    xh_bf = xh_ref[0].reshape(2 * W, Cin)         # bf16 halo rows (above/below)

    # ---- conv1 (1x1, BN1 scale folded into w1) + shift + relu -------------
    h1 = lax.dot_general(x_bf, w1_ref[...], (((1,), (0,)), ((), ())),
                         preferred_element_type=jnp.float32)       # (TH*W, P)
    h1 = jnp.maximum(h1 + b1_ref[...], 0.0)
    h1_bf = h1.astype(jnp.bfloat16).reshape(TH, W, P)

    # conv1 on the two halo rows that feed conv2's receptive field.
    hh = lax.dot_general(xh_bf, w1_ref[...], (((1,), (0,)), ((), ())),
                         preferred_element_type=jnp.float32)       # (2*W, P)
    hh = jnp.maximum(hh + b1_ref[...], 0.0).astype(jnp.bfloat16).reshape(2, W, P)

    # ---- conv2 (3x3, stride=1, pad=1) + shift + relu -----------------------
    # pad_ref rows: [halo_top, TH tile rows, halo_bot]; columns 0 and W+1 are
    # the conv2 zero padding in W.  Only the halo/border is written
    # separately — the interior is fully overwritten each step.
    zcol = jnp.zeros((TH + 2, 1, P), pad_ref.dtype)
    pad_ref[:, pl.ds(0, 1), :] = zcol
    pad_ref[:, pl.ds(W + 1, 1), :] = zcol
    pad_ref[pl.ds(0, 1), pl.ds(1, W), :] = hh[0:1]
    pad_ref[pl.ds(TH + 1, 1), pl.ds(1, W), :] = hh[1:2]
    pad_ref[pl.ds(1, TH), pl.ds(1, W), :] = h1_bf

    # Frame-edge halo rows are conv2 zero padding, not data.
    @pl.when(i == 0)
    def _():
        pad_ref[pl.ds(0, 1), pl.ds(1, W), :] = jnp.zeros((1, W, P),
                                                         pad_ref.dtype)

    @pl.when(i == n_row_tiles - 1)
    def _():
        pad_ref[pl.ds(TH + 1, 1), pl.ds(1, W), :] = jnp.zeros((1, W, P),
                                                              pad_ref.dtype)

    # im2col built in place: each tap lands in its own lane range of the
    # patch scratch; the center tap (kh=kw=1) is h1 itself (no pad_ref read).
    for t in range(9):
        kh, kw = divmod(t, 3)
        if (kh, kw) == (1, 1):
            patch_ref[:, :, pl.ds(t * P, P)] = h1_bf
        else:
            patch_ref[:, :, pl.ds(t * P, P)] = pad_ref[pl.ds(kh, TH),
                                                       pl.ds(kw, W), :]

    patch = patch_ref[...].reshape(TH * W, 9 * P)                  # bf16
    h2 = lax.dot_general(patch, w2_ref[...], (((1,), (0,)), ((), ())),
                         preferred_element_type=jnp.float32)       # (TH*W, P)
    h2 = jnp.maximum(h2 + b2_ref[...], 0.0)

    # ---- conv3 (1x1) + shift + residual add (f32) + relu -------------------
    h3 = lax.dot_general(h2.astype(jnp.bfloat16), w3_ref[...],
                         (((1,), (0,)), ((), ())),
                         preferred_element_type=jnp.float32)       # (TH*W, Cout)
    h3 = h3 + b3_ref[...] + x_bf.astype(jnp.float32)
    o_ref[0] = jnp.maximum(h3, 0.0).reshape(TH, W, Cout).astype(o_ref.dtype)


def _fold_bn(gamma, beta, mean, var, eps=1e-5):
    scale = gamma / jnp.sqrt(var + eps)
    shift = beta - mean * scale
    return scale, shift


def bottleneck_forward_nhwc(x_nhwc, w1_oihw, bn1, w2_oihw, bn2, w3_oihw, bn3,
                            eps=1e-5, row_tile=8):
    """Fused DRN Bottleneck forward (stride=1, no downsample, eval-mode BN).

    x_nhwc: (N, H, W, Cin) activations (cast to bf16 at the kernel boundary).
    Conv weights in PyTorch OIHW layout; bn* = (gamma, beta, mean, var).
    Returns (N, H, W, Cout) bfloat16.
    """
    N, H, W, Cin = x_nhwc.shape
    P = w1_oihw.shape[0]
    Cout = w3_oihw.shape[0]
    assert Cin == Cout, "residual add requires in_planes == planes * expansion"

    TH = row_tile if (H % row_tile == 0) else H
    HT = H // TH

    s1, b1 = _fold_bn(*bn1, eps)
    s2, b2 = _fold_bn(*bn2, eps)
    s3, b3 = _fold_bn(*bn3, eps)

    # Fold BN scales into conv weights (per output channel); cast to bf16.
    w1 = (jnp.transpose(w1_oihw[:, :, 0, 0], (1, 0)) * s1).astype(jnp.bfloat16)
    w2_hwio = jnp.transpose(w2_oihw, (2, 3, 1, 0)) * s2           # (3,3,P,P)
    w2 = w2_hwio.reshape(9 * P, P).astype(jnp.bfloat16)           # kh,kw,cin order
    w3 = (jnp.transpose(w3_oihw[:, :, 0, 0], (1, 0)) * s3).astype(jnp.bfloat16)

    x = x_nhwc.astype(jnp.bfloat16)

    # Halo side input: rows i*TH-1 (above) and i*TH+TH (below) per row tile,
    # interleaved as (N, 2*HT, W, Cin).  Frame-edge entries are zero
    # placeholders (the kernel zeroes those halo rows anyway).  Costs only
    # 2/TH extra x reads vs. overlapping-window re-fetches.
    zero_row = jnp.zeros((N, 1, W, Cin), x.dtype)
    top = jnp.concatenate([zero_row, x[:, TH - 1:H - 1:TH]], axis=1)
    bot = jnp.concatenate([x[:, TH:H:TH], zero_row], axis=1)
    x_halo = jnp.stack([top, bot], axis=2).reshape(N, 2 * HT, W, Cin)

    # VMEM budget: double-buffered activation tiles + weights + scratch +
    # in-kernel f32 working set, 2x headroom, capped below physical VMEM.
    Wp = ((W + 2 + 7) // 8) * 8
    est = (2 * TH * W * (Cin + Cout) * 2                      # x/out tiles (bf16)
           + 2 * 2 * W * Cin * 2                              # halo tiles
           + 2 * (Cin * P + 9 * P * P + P * Cout) * 2         # weights (2-buf)
           + 2 * (2 * P + Cout) * 4                           # bias shifts
           + (TH + 2) * Wp * P * 2                            # pad scratch
           + TH * W * 9 * P * 2                               # patch scratch
           + TH * W * (9 * P + 2 * P + Cin + Cout) * 4)       # f32 working set
    try:
        vmem_cap = int(pltpu.get_tpu_info().vmem_capacity_bytes)
    except Exception:
        vmem_cap = 64 * 2 ** 20                               # v7x-safe fallback
    vmem_limit = int(min(max(2 * est, 16 * 2 ** 20), vmem_cap - 8 * 2 ** 20))

    out = pl.pallas_call(
        bottleneck_kernel,
        out_shape=jax.ShapeDtypeStruct((N, H, W, Cout), jnp.bfloat16),
        grid_spec=pltpu.PrefetchScalarGridSpec(
            num_scalar_prefetch=0,
            grid=(N, HT),
            in_specs=[
                pl.BlockSpec((1, TH, W, Cin),  lambda n, i: (n, i, 0, 0)),
                pl.BlockSpec((1, 2, W, Cin),   lambda n, i: (n, i, 0, 0)),
                pl.BlockSpec((Cin, P),         lambda n, i: (0, 0)),
                pl.BlockSpec((1, P),           lambda n, i: (0, 0)),
                pl.BlockSpec((9 * P, P),       lambda n, i: (0, 0)),
                pl.BlockSpec((1, P),           lambda n, i: (0, 0)),
                pl.BlockSpec((P, Cout),        lambda n, i: (0, 0)),
                pl.BlockSpec((1, Cout),        lambda n, i: (0, 0)),
            ],
            out_specs=pl.BlockSpec((1, TH, W, Cout), lambda n, i: (n, i, 0, 0)),
            scratch_shapes=[
                pltpu.VMEM((TH + 2, Wp, P), jnp.bfloat16),   # padded conv2 input
                pltpu.VMEM((TH, W, 9 * P), jnp.bfloat16),    # im2col patch
            ],
        ),
        compiler_params=pltpu.CompilerParams(
            dimension_semantics=("parallel", "parallel"),
            vmem_limit_bytes=vmem_limit),
    )(x, x_halo, w1, b1[None, :], w2, b2[None, :], w3, b3[None, :])

    return out


def _reference_nhwc(x, w1_oihw, bn1, w2_oihw, bn2, w3_oihw, bn3, eps=1e-5):
    def conv(a, w_oihw, pad):
        w = jnp.transpose(w_oihw, (2, 3, 1, 0))
        return lax.conv_general_dilated(
            a, w, (1, 1), pad, dimension_numbers=("NHWC", "HWIO", "NHWC"))

    def bn(a, params):
        g, b, m, v = params
        return (a - m) * (g / jnp.sqrt(v + eps)) + b

    h = jnp.maximum(bn(conv(x, w1_oihw, "VALID"), bn1), 0.0)
    h = jnp.maximum(bn(conv(h, w2_oihw, ((1, 1), (1, 1))), bn2), 0.0)
    h = bn(conv(h, w3_oihw, "VALID"), bn3)
    return jnp.maximum(h + x, 0.0)


if __name__ == "__main__":
    # Small shapes: batch=2, planes=4, in_planes = planes*4 = 16, spatial 16x16
    # -> grid (N=2, H/TH=2) exercises both interior and frame-edge halos.
    # NOTE: toy channel counts (<128 lanes) are for correctness only.
    N, planes, H, W = 2, 4, 16, 16
    in_planes = planes * 4
    Cout = planes * 4

    key = jax.random.PRNGKey(0)
    ks = list(jax.random.split(key, 16))

    # PyTorch-style NCHW f32 input, converted ONCE to NHWC bf16 here — this
    # models the once-per-network layout boundary, not a per-block transpose.
    x_nchw = jax.random.normal(ks[0], (N, in_planes, H, W), jnp.float32)
    x_nhwc = jnp.transpose(x_nchw, (0, 2, 3, 1)).astype(jnp.bfloat16)

    w1_oihw = jax.random.normal(ks[1], (planes, in_planes, 1, 1), jnp.float32) * 0.2
    w2_oihw = jax.random.normal(ks[2], (planes, planes, 3, 3), jnp.float32) * 0.2
    w3_oihw = jax.random.normal(ks[3], (Cout, planes, 1, 1), jnp.float32) * 0.2

    def make_bn(kg, kb, km, kv, c):
        gamma = 1.0 + 0.1 * jax.random.normal(kg, (c,), jnp.float32)
        beta = 0.1 * jax.random.normal(kb, (c,), jnp.float32)
        mean = 0.1 * jax.random.normal(km, (c,), jnp.float32)
        var = 0.5 + jnp.abs(jax.random.normal(kv, (c,), jnp.float32)) * 0.5
        return gamma, beta, mean, var

    bn1 = make_bn(ks[4], ks[5], ks[6], ks[7], planes)
    bn2 = make_bn(ks[8], ks[9], ks[10], ks[11], planes)
    bn3 = make_bn(ks[12], ks[13], ks[14], ks[15], Cout)

    out = bottleneck_forward_nhwc(x_nhwc, w1_oihw, bn1, w2_oihw, bn2,
                                  w3_oihw, bn3)
    out = jax.block_until_ready(out)

    # Reference on the same bf16-quantized input so only kernel error counts.
    ref = _reference_nhwc(x_nhwc.astype(jnp.float32), w1_oihw, bn1,
                          w2_oihw, bn2, w3_oihw, bn3)

    assert out.shape == (N, H, W, Cout)
    assert out.dtype == jnp.bfloat16
    out_f32 = out.astype(jnp.float32)
    max_diff = float(jnp.max(jnp.abs(out_f32 - ref)))
    # bf16 matmul operands + bf16 output -> loosened tolerance vs the f32 ref.
    assert jnp.allclose(out_f32, ref, atol=1e-1, rtol=3e-2), (
        f"max abs diff = {max_diff}")

    print("KERNEL_OK")
</pallas_src>

<mosaic_0001>
module attributes {stable_mosaic.version = 11 : i64} {
  func.func @bottleneck_kernel(%arg0: i32, %arg1: i32, %arg2: memref<1x8x16x16xbf16, #tpu.memory_space<vmem>>, %arg3: memref<1x2x16x16xbf16, #tpu.memory_space<vmem>>, %arg4: memref<16x4xbf16, #tpu.memory_space<vmem>>, %arg5: memref<1x4xf32, #tpu.memory_space<vmem>>, %arg6: memref<36x4xbf16, #tpu.memory_space<vmem>>, %arg7: memref<1x4xf32, #tpu.memory_space<vmem>>, %arg8: memref<4x16xbf16, #tpu.memory_space<vmem>>, %arg9: memref<1x16xf32, #tpu.memory_space<vmem>>, %arg10: memref<1x8x16x16xbf16, #tpu.memory_space<vmem>>, %arg11: memref<10x24x4xbf16, #tpu.memory_space<vmem>>, %arg12: memref<8x16x36xbf16, #tpu.memory_space<vmem>>) attributes {dimension_semantics = [#tpu.dimension_semantics<parallel>, #tpu.dimension_semantics<parallel>], iteration_bounds = array<i64: 2, 2>, scalar_prefetch = 0 : i64, scratch_operands = 2 : i64, tpu.core_type = #tpu.core_type<tc>, window_params = [{transform_indices = @transform_0, window_bounds = array<i64: 1, 8, 16, 16>}, {transform_indices = @transform_1, window_bounds = array<i64: 1, 2, 16, 16>}, {pipeline_mode = #tpu.pipeline_mode<synchronous>, transform_indices = @transform_2, window_bounds = array<i64: 16, 4>}, {pipeline_mode = #tpu.pipeline_mode<synchronous>, transform_indices = @transform_3, window_bounds = array<i64: 1, 4>}, {pipeline_mode = #tpu.pipeline_mode<synchronous>, transform_indices = @transform_4, window_bounds = array<i64: 36, 4>}, {pipeline_mode = #tpu.pipeline_mode<synchronous>, transform_indices = @transform_5, window_bounds = array<i64: 1, 4>}, {pipeline_mode = #tpu.pipeline_mode<synchronous>, transform_indices = @transform_6, window_bounds = array<i64: 4, 16>}, {pipeline_mode = #tpu.pipeline_mode<synchronous>, transform_indices = @transform_7, window_bounds = array<i64: 1, 16>}, {transform_indices = @transform_8, window_bounds = array<i64: 1, 8, 16, 16>}]} {
    %c0 = arith.constant 0 : index
    %c0_0 = arith.constant 0 : index
    %c0_1 = arith.constant 0 : index
    %c0_2 = arith.constant 0 : index
    %0 = vector.load %arg2[%c0, %c0_0, %c0_1, %c0_2] : memref<1x8x16x16xbf16, #tpu.memory_space<vmem>>, vector<1x8x16x16xbf16>
    %1 = vector.shape_cast %0 : vector<1x8x16x16xbf16> to vector<8x16x16xbf16>
    %2 = vector.shape_cast %1 : vector<8x16x16xbf16> to vector<128x16xbf16>
    %c0_3 = arith.constant 0 : index
    %c0_4 = arith.constant 0 : index
    %c0_5 = arith.constant 0 : index
    %c0_6 = arith.constant 0 : index
    %3 = vector.load %arg3[%c0_3, %c0_4, %c0_5, %c0_6] : memref<1x2x16x16xbf16, #tpu.memory_space<vmem>>, vector<1x2x16x16xbf16>
    %4 = vector.shape_cast %3 : vector<1x2x16x16xbf16> to vector<2x16x16xbf16>
    %5 = vector.shape_cast %4 : vector<2x16x16xbf16> to vector<32x16xbf16>
    %c0_7 = arith.constant 0 : index
    %c0_8 = arith.constant 0 : index
    %6 = vector.load %arg4[%c0_7, %c0_8] : memref<16x4xbf16, #tpu.memory_space<vmem>>, vector<16x4xbf16>
    %cst = arith.constant dense<0.000000e+00> : vector<128x4xf32>
    %7 = tpu.matmul %2, %6, %cst {dimension_numbers = #tpu.dot_dimension_numbers<[1], [0], [0], [1], [0, 0, 1, 1], [], []>} : vector<128x16xbf16>, vector<16x4xbf16>, vector<128x4xf32> -> vector<128x4xf32>
    %c0_9 = arith.constant 0 : index
    %c0_10 = arith.constant 0 : index
    %8 = vector.load %arg5[%c0_9, %c0_10] : memref<1x4xf32, #tpu.memory_space<vmem>>, vector<1x4xf32>
    %9 = vector.broadcast %8 : vector<1x4xf32> to vector<128x4xf32>
    %10 = arith.addf %7, %9 : vector<128x4xf32>
    %cst_11 = arith.constant 0.000000e+00 : f32
    %11 = vector.broadcast %cst_11 : f32 to vector<128x4xf32>
    %12 = arith.maximumf %10, %11 : vector<128x4xf32>
    %13 = arith.truncf %12 : vector<128x4xf32> to vector<128x4xbf16>
    %14 = vector.shape_cast %13 : vector<128x4xbf16> to vector<8x16x4xbf16>
    %c0_12 = arith.constant 0 : index
    %c0_13 = arith.constant 0 : index
    %15 = vector.load %arg4[%c0_12, %c0_13] : memref<16x4xbf16, #tpu.memory_space<vmem>>, vector<16x4xbf16>
    %cst_14 = arith.constant dense<0.000000e+00> : vector<32x4xf32>
    %16 = tpu.matmul %5, %15, %cst_14 {dimension_numbers = #tpu.dot_dimension_numbers<[1], [0], [0], [1], [0, 0, 1, 1], [], []>} : vector<32x16xbf16>, vector<16x4xbf16>, vector<32x4xf32> -> vector<32x4xf32>
    %c0_15 = arith.constant 0 : index
    %c0_16 = arith.constant 0 : index
    %17 = vector.load %arg5[%c0_15, %c0_16] : memref<1x4xf32, #tpu.memory_space<vmem>>, vector<1x4xf32>
    %18 = vector.broadcast %17 : vector<1x4xf32> to vector<32x4xf32>
    %19 = arith.addf %16, %18 : vector<32x4xf32>
    %cst_17 = arith.constant 0.000000e+00 : f32
    %20 = vector.broadcast %cst_17 : f32 to vector<32x4xf32>
    %21 = arith.maximumf %19, %20 : vector<32x4xf32>
    %22 = arith.truncf %21 : vector<32x4xf32> to vector<32x4xbf16>
    %23 = vector.shape_cast %22 : vector<32x4xbf16> to vector<2x16x4xbf16>
    %cst_18 = arith.constant 0.000000e+00 : bf16
    %24 = vector.broadcast %cst_18 : bf16 to vector<10x1x4xbf16>
    %c0_19 = arith.constant 0 : index
    %c0_20 = arith.constant 0 : index
    %c0_21 = arith.constant 0 : index
    %25 = vector.load %arg11[%c0_19, %c0_20, %c0_21] : memref<10x24x4xbf16, #tpu.memory_space<vmem>>, vector<10x1x4xbf16>
    tpu.vector_store %arg11[%c0_19, %c0_20, %c0_21], %24 {strides = array<i32>} : memref<10x24x4xbf16, #tpu.memory_space<vmem>>, vector<10x1x4xbf16>,
    %c0_22 = arith.constant 0 : index
    %c17 = arith.constant 17 : index
    %c0_23 = arith.constant 0 : index
    %26 = vector.load %arg11[%c0_22, %c17, %c0_23] : memref<10x24x4xbf16, #tpu.memory_space<vmem>>, vector<10x1x4xbf16>
    tpu.vector_store %arg11[%c0_22, %c17, %c0_23], %24 {strides = array<i32>} : memref<10x24x4xbf16, #tpu.memory_space<vmem>>, vector<10x1x4xbf16>,
    %27 = vector.extract_strided_slice %23 {offsets = [0, 0, 0], sizes = [1, 16, 4], strides = [1, 1, 1]} : vector<2x16x4xbf16> to vector<1x16x4xbf16>
    %c0_24 = arith.constant 0 : index
    %c1 = arith.constant 1 : index
    %c0_25 = arith.constant 0 : index
    %28 = vector.load %arg11[%c0_24, %c1, %c0_25] : memref<10x24x4xbf16, #tpu.memory_space<vmem>>, vector<1x16x4xbf16>
    tpu.vector_store %arg11[%c0_24, %c1, %c0_25], %27 {strides = array<i32>} : memref<10x24x4xbf16, #tpu.memory_space<vmem>>, vector<1x16x4xbf16>,
    %29 = vector.extract_strided_slice %23 {offsets = [1, 0, 0], sizes = [1, 16, 4], strides = [1, 1, 1]} : vector<2x16x4xbf16> to vector<1x16x4xbf16>
    %c9 = arith.constant 9 : index
    %c1_26 = arith.constant 1 : index
    %c0_27 = arith.constant 0 : index
    %30 = vector.load %arg11[%c9, %c1_26, %c0_27] : memref<10x24x4xbf16, #tpu.memory_space<vmem>>, vector<1x16x4xbf16>
    tpu.vector_store %arg11[%c9, %c1_26, %c0_27], %29 {strides = array<i32>} : memref<10x24x4xbf16, #tpu.memory_space<vmem>>, vector<1x16x4xbf16>,
    %c1_28 = arith.constant 1 : index
    %c1_29 = arith.constant 1 : index
    %c0_30 = arith.constant 0 : index
    %31 = vector.load %arg11[%c1_28, %c1_29, %c0_30] : memref<10x24x4xbf16, #tpu.memory_space<vmem>>, vector<8x16x4xbf16>
    tpu.vector_store %arg11[%c1_28, %c1_29, %c0_30], %14 {strides = array<i32>} : memref<10x24x4xbf16, #tpu.memory_space<vmem>>, vector<8x16x4xbf16>,
    %c0_i32 = arith.constant 0 : i32
    %32 = arith.cmpi eq, %arg1, %c0_i32 : i32
    %33 = arith.extui %32 : i1 to i32
    %c0_i32_31 = arith.constant 0 : i32
    %34 = arith.cmpi ne, %33, %c0_i32_31 : i32
    scf.if %34 {
      %cst_94 = arith.constant 0.000000e+00 : bf16
      %79 = vector.broadcast %cst_94 : bf16 to vector<1x16x4xbf16>
      %c0_95 = arith.constant 0 : index
      %c1_96 = arith.constant 1 : index
      %c0_97 = arith.constant 0 : index
      %80 = vector.load %arg11[%c0_95, %c1_96, %c0_97] : memref<10x24x4xbf16, #tpu.memory_space<vmem>>, vector<1x16x4xbf16>
      tpu.vector_store %arg11[%c0_95, %c1_96, %c0_97], %79 {strides = array<i32>} : memref<10x24x4xbf16, #tpu.memory_space<vmem>>, vector<1x16x4xbf16>,
    } else {
    }
    %c1_i32 = arith.constant 1 : i32
    %35 = arith.cmpi eq, %arg1, %c1_i32 : i32
    %36 = arith.extui %35 : i1 to i32
    %c0_i32_32 = arith.constant 0 : i32
    %37 = arith.cmpi ne, %36, %c0_i32_32 : i32
    scf.if %37 {
      %cst_94 = arith.constant 0.000000e+00 : bf16
      %79 = vector.broadcast %cst_94 : bf16 to vector<1x16x4xbf16>
      %c9_95 = arith.constant 9 : index
      %c1_96 = arith.constant 1 : index
      %c0_97 = arith.constant 0 : index
      %80 = vector.load %arg11[%c9_95, %c1_96, %c0_97] : memref<10x24x4xbf16, #tpu.memory_space<vmem>>, vector<1x16x4xbf16>
      tpu.vector_store %arg11[%c9_95, %c1_96, %c0_97], %79 {strides = array<i32>} : memref<10x24x4xbf16, #tpu.memory_space<vmem>>, vector<1x16x4xbf16>,
    } else {
    }
    %c0_33 = arith.constant 0 : index
    %c0_34 = arith.constant 0 : index
    %c0_35 = arith.constant 0 : index
    %38 = vector.load %arg11[%c0_33, %c0_34, %c0_35] : memref<10x24x4xbf16, #tpu.memory_space<vmem>>, vector<8x16x4xbf16>
    %c0_36 = arith.constant 0 : index
    %c0_37 = arith.constant 0 : index
    %c0_38 = arith.constant 0 : index
    %39 = vector.load %arg12[%c0_36, %c0_37, %c0_38] : memref<8x16x36xbf16, #tpu.memory_space<vmem>>, vector<8x16x4xbf16>
    tpu.vector_store %arg12[%c0_36, %c0_37, %c0_38], %38 {strides = array<i32>} : memref<8x16x36xbf16, #tpu.memory_space<vmem>>, vector<8x16x4xbf16>,
    %c0_39 = arith.constant 0 : index
    %c1_40 = arith.constant 1 : index
    %c0_41 = arith.constant 0 : index
    %40 = vector.load %arg11[%c0_39, %c1_40, %c0_41] : memref<10x24x4xbf16, #tpu.memory_space<vmem>>, vector<8x16x4xbf16>
    %c0_42 = arith.constant 0 : index
    %c0_43 = arith.constant 0 : index
    %c4 = arith.constant 4 : index
    %41 = vector.load %arg12[%c0_42, %c0_43, %c4] : memref<8x16x36xbf16, #tpu.memory_space<vmem>>, vector<8x16x4xbf16>
    tpu.vector_store %arg12[%c0_42, %c0_43, %c4], %40 {strides = array<i32>} : memref<8x16x36xbf16, #tpu.memory_space<vmem>>, vector<8x16x4xbf16>,
    %c0_44 = arith.constant 0 : index
    %c2 = arith.constant 2 : index
    %c0_45 = arith.constant 0 : index
    %42 = vector.load %arg11[%c0_44, %c2, %c0_45] : memref<10x24x4xbf16, #tpu.memory_space<vmem>>, vector<8x16x4xbf16>
    %c0_46 = arith.constant 0 : index
    %c0_47 = arith.constant 0 : index
    %c8 = arith.constant 8 : index
    %43 = vector.load %arg12[%c0_46, %c0_47, %c8] : memref<8x16x36xbf16, #tpu.memory_space<vmem>>, vector<8x16x4xbf16>
    tpu.vector_store %arg12[%c0_46, %c0_47, %c8], %42 {strides = array<i32>} : memref<8x16x36xbf16, #tpu.memory_space<vmem>>, vector<8x16x4xbf16>,
    %c1_48 = arith.constant 1 : index
    %c0_49 = arith.constant 0 : index
    %c0_50 = arith.constant 0 : index
    %44 = vector.load %arg11[%c1_48, %c0_49, %c0_50] : memref<10x24x4xbf16, #tpu.memory_space<vmem>>, vector<8x16x4xbf16>
    %c0_51 = arith.constant 0 : index
    %c0_52 = arith.constant 0 : index
    %c12 = arith.constant 12 : index
    %45 = vector.load %arg12[%c0_51, %c0_52, %c12] : memref<8x16x36xbf16, #tpu.memory_space<vmem>>, vector<8x16x4xbf16>
    tpu.vector_store %arg12[%c0_51, %c0_52, %c12], %44 {strides = array<i32>} : memref<8x16x36xbf16, #tpu.memory_space<vmem>>, vector<8x16x4xbf16>,
    %c0_53 = arith.constant 0 : index
    %c0_54 = arith.constant 0 : index
    %c16 = arith.constant 16 : index
    %46 = vector.load %arg12[%c0_53, %c0_54, %c16] : memref<8x16x36xbf16, #tpu.memory_space<vmem>>, vector<8x16x4xbf16>
    tpu.vector_store %arg12[%c0_53, %c0_54, %c16], %14 {strides = array<i32>} : memref<8x16x36xbf16, #tpu.memory_space<vmem>>, vector<8x16x4xbf16>,
    %c1_55 = arith.constant 1 : index
    %c2_56 = arith.constant 2 : index
    %c0_57 = arith.constant 0 : index
    %47 = vector.load %arg11[%c1_55, %c2_56, %c0_57] : memref<10x24x4xbf16, #tpu.memory_space<vmem>>, vector<8x16x4xbf16>
    %c0_58 = arith.constant 0 : index
    %c0_59 = arith.constant 0 : index
    %c20 = arith.constant 20 : index
    %48 = vector.load %arg12[%c0_58, %c0_59, %c20] : memref<8x16x36xbf16, #tpu.memory_space<vmem>>, vector<8x16x4xbf16>
    tpu.vector_store %arg12[%c0_58, %c0_59, %c20], %47 {strides = array<i32>} : memref<8x16x36xbf16, #tpu.memory_space<vmem>>, vector<8x16x4xbf16>,
    %c2_60 = arith.constant 2 : index
    %c0_61 = arith.constant 0 : index
    %c0_62 = arith.constant 0 : index
    %49 = vector.load %arg11[%c2_60, %c0_61, %c0_62] : memref<10x24x4xbf16, #tpu.memory_space<vmem>>, vector<8x16x4xbf16>
    %c0_63 = arith.constant 0 : index
    %c0_64 = arith.constant 0 : index
    %c24 = arith.constant 24 : index
    %50 = vector.load %arg12[%c0_63, %c0_64, %c24] : memref<8x16x36xbf16, #tpu.memory_space<vmem>>, vector<8x16x4xbf16>
    tpu.vector_store %arg12[%c0_63, %c0_64, %c24], %49 {strides = array<i32>} : memref<8x16x36xbf16, #tpu.memory_space<vmem>>, vector<8x16x4xbf16>,
    %c2_65 = arith.constant 2 : index
    %c1_66 = arith.constant 1 : index
    %c0_67 = arith.constant 0 : index
    %51 = vector.load %arg11[%c2_65, %c1_66, %c0_67] : memref<10x24x4xbf16, #tpu.memory_space<vmem>>, vector<8x16x4xbf16>
    %c0_68 = arith.constant 0 : index
    %c0_69 = arith.constant 0 : index
    %c28 = arith.constant 28 : index
    %52 = vector.load %arg12[%c0_68, %c0_69, %c28] : memref<8x16x36xbf16, #tpu.memory_space<vmem>>, vector<8x16x4xbf16>
    tpu.vector_store %arg12[%c0_68, %c0_69, %c28], %51 {strides = array<i32>} : memref<8x16x36xbf16, #tpu.memory_space<vmem>>, vector<8x16x4xbf16>,
    %c2_70 = arith.constant 2 : index
    %c2_71 = arith.constant 2 : index
    %c0_72 = arith.constant 0 : index
    %53 = vector.load %arg11[%c2_70, %c2_71, %c0_72] : memref<10x24x4xbf16, #tpu.memory_space<vmem>>, vector<8x16x4xbf16>
    %c0_73 = arith.constant 0 : index
    %c0_74 = arith.constant 0 : index
    %c32 = arith.constant 32 : index
    %54 = vector.load %arg12[%c0_73, %c0_74, %c32] : memref<8x16x36xbf16, #tpu.memory_space<vmem>>, vector<8x16x4xbf16>
    tpu.vector_store %arg12[%c0_73, %c0_74, %c32], %53 {strides = array<i32>} : memref<8x16x36xbf16, #tpu.memory_space<vmem>>, vector<8x16x4xbf16>,
    %c0_75 = arith.constant 0 : index
    %c0_76 = arith.constant 0 : index
    %c0_77 = arith.constant 0 : index
    %55 = vector.load %arg12[%c0_75, %c0_76, %c0_77] : memref<8x16x36xbf16, #tpu.memory_space<vmem>>, vector<8x16x36xbf16>
    %56 = vector.shape_cast %55 : vector<8x16x36xbf16> to vector<128x36xbf16>
    %c0_78 = arith.constant 0 : index
    %c0_79 = arith.constant 0 : index
    %57 = vector.load %arg6[%c0_78, %c0_79] : memref<36x4xbf16, #tpu.memory_space<vmem>>, vector<36x4xbf16>
    %cst_80 = arith.constant dense<0.000000e+00> : vector<128x4xf32>
    %58 = tpu.matmul %56, %57, %cst_80 {dimension_numbers = #tpu.dot_dimension_numbers<[1], [0], [0], [1], [0, 0, 1, 1], [], []>} : vector<128x36xbf16>, vector<36x4xbf16>, vector<128x4xf32> -> vector<128x4xf32>
    %c0_81 = arith.constant 0 : index
    %c0_82 = arith.constant 0 : index
    %59 = vector.load %arg7[%c0_81, %c0_82] : memref<1x4xf32, #tpu.memory_space<vmem>>, vector<1x4xf32>
    %60 = vector.broadcast %59 : vector<1x4xf32> to vector<128x4xf32>
    %61 = arith.addf %58, %60 : vector<128x4xf32>
    %cst_83 = arith.constant 0.000000e+00 : f32
    %62 = vector.broadcast %cst_83 : f32 to vector<128x4xf32>
    %63 = arith.maximumf %61, %62 : vector<128x4xf32>
    %64 = arith.truncf %63 : vector<128x4xf32> to vector<128x4xbf16>
    %c0_84 = arith.constant 0 : index
    %c0_85 = arith.constant 0 : index
    %65 = vector.load %arg8[%c0_84, %c0_85] : memref<4x16xbf16, #tpu.memory_space<vmem>>, vector<4x16xbf16>
    %cst_86 = arith.constant dense<0.000000e+00> : vector<128x16xf32>
    %66 = tpu.matmul %64, %65, %cst_86 {dimension_numbers = #tpu.dot_dimension_numbers<[1], [0], [0], [1], [0, 0, 1, 1], [], []>} : vector<128x4xbf16>, vector<4x16xbf16>, vector<128x16xf32> -> vector<128x16xf32>
    %c0_87 = arith.constant 0 : index
    %c0_88 = arith.constant 0 : index
    %67 = vector.load %arg9[%c0_87, %c0_88] : memref<1x16xf32, #tpu.memory_space<vmem>>, vector<1x16xf32>
    %68 = vector.broadcast %67 : vector<1x16xf32> to vector<128x16xf32>
    %69 = arith.addf %66, %68 : vector<128x16xf32>
    %70 = arith.extf %2 : vector<128x16xbf16> to vector<128x16xf32>
    %71 = arith.addf %69, %70 : vector<128x16xf32>
    %cst_89 = arith.constant 0.000000e+00 : f32
    %72 = vector.broadcast %cst_89 : f32 to vector<128x16xf32>
    %73 = arith.maximumf %71, %72 : vector<128x16xf32>
    %74 = vector.shape_cast %73 : vector<128x16xf32> to vector<8x16x16xf32>
    %75 = arith.truncf %74 : vector<8x16x16xf32> to vector<8x16x16xbf16>
    %c0_90 = arith.constant 0 : index
    %c0_91 = arith.constant 0 : index
    %c0_92 = arith.constant 0 : index
    %c0_93 = arith.constant 0 : index
    %76 = vector.load %arg10[%c0_90, %c0_91, %c0_92, %c0_93] : memref<1x8x16x16xbf16, #tpu.memory_space<vmem>>, vector<1x8x16x16xbf16>
    %77 = vector.shape_cast %76 : vector<1x8x16x16xbf16> to vector<8x16x16xbf16>
    %78 = vector.shape_cast %75 : vector<8x16x16xbf16> to vector<1x8x16x16xbf16>
    tpu.vector_store %arg10[%c0_90, %c0_91, %c0_92, %c0_93], %78 {strides = array<i32>} : memref<1x8x16x16xbf16, #tpu.memory_space<vmem>>, vector<1x8x16x16xbf16>,
    return
  }
  func.func @transform_0(%arg0: i32, %arg1: i32) -> (i32, i32, i32, i32) {
    %c0_i32 = arith.constant 0 : i32
    %c0_i32_0 = arith.constant 0 : i32
    %c0_i32_1 = arith.constant 0 : i32
    return %arg0, %arg1, %c0_i32, %c0_i32_0 : i32, i32, i32, i32
  }
  func.func @transform_1(%arg0: i32, %arg1: i32) -> (i32, i32, i32, i32) {
    %c0_i32 = arith.constant 0 : i32
    %c0_i32_0 = arith.constant 0 : i32
    %c0_i32_1 = arith.constant 0 : i32
    return %arg0, %arg1, %c0_i32, %c0_i32_0 : i32, i32, i32, i32
  }
  func.func @transform_2(%arg0: i32, %arg1: i32) -> (i32, i32) {
    %c0_i32 = arith.constant 0 : i32
    %c0_i32_0 = arith.constant 0 : i32
    %c0_i32_1 = arith.constant 0 : i32
    return %c0_i32, %c0_i32_0 : i32, i32
  }
  func.func @transform_3(%arg0: i32, %arg1: i32) -> (i32, i32) {
    %c0_i32 = arith.constant 0 : i32
    %c0_i32_0 = arith.constant 0 : i32
    %c0_i32_1 = arith.constant 0 : i32
    return %c0_i32, %c0_i32_0 : i32, i32
  }
  func.func @transform_4(%arg0: i32, %arg1: i32) -> (i32, i32) {
    %c0_i32 = arith.constant 0 : i32
    %c0_i32_0 = arith.constant 0 : i32
    %c0_i32_1 = arith.constant 0 : i32
    return %c0_i32, %c0_i32_0 : i32, i32
  }
  func.func @transform_5(%arg0: i32, %arg1: i32) -> (i32, i32) {
    %c0_i32 = arith.constant 0 : i32
    %c0_i32_0 = arith.constant 0 : i32
    %c0_i32_1 = arith.constant 0 : i32
    return %c0_i32, %c0_i32_0 : i32, i32
  }
  func.func @transform_6(%arg0: i32, %arg1: i32) -> (i32, i32) {
    %c0_i32 = arith.constant 0 : i32
    %c0_i32_0 = arith.constant 0 : i32
    %c0_i32_1 = arith.constant 0 : i32
    return %c0_i32, %c0_i32_0 : i32, i32
  }
  func.func @transform_7(%arg0: i32, %arg1: i32) -> (i32, i32) {
    %c0_i32 = arith.constant 0 : i32
    %c0_i32_0 = arith.constant 0 : i32
    %c0_i32_1 = arith.constant 0 : i32
    return %c0_i32, %c0_i32_0 : i32, i32
  }
  func.func @transform_8(%arg0: i32, %arg1: i32) -> (i32, i32, i32, i32) {
    %c0_i32 = arith.constant 0 : i32
    %c0_i32_0 = arith.constant 0 : i32
    %c0_i32_1 = arith.constant 0 : i32
    return %arg0, %arg1, %c0_i32, %c0_i32_0 : i32, i32, i32, i32
  }
}

</mosaic_0001>

<llo_original>
// kernel: tpu_custom_call.1
$region0: #{tpu_custom_call.1}
  #allocation0 [shape = 'u32[]', space=smem, size = 0x4, offset = 0x4, fixed_abs, tag = 'smem constant byte address 0x4 - core index']
  #allocation1 [shape = 'u32[144,128]{1,0:T(1,128)}', space=vmem, size = 0x12000, scoped, tag = 'internal scratch']
  #allocation2 [shape = 'bf16[10,24,4]{2,1,0:T(8,128)(2,1)}', space=vmem, size = 0xf000, scoped, tag = 'scratch operand']
  #allocation3 [shape = 'bf16[8,16,36]{2,1,0:T(8,128)(2,1)}', space=vmem, size = 0x8000, scoped, tag = 'scratch operand']
  %s0 = inlined_call_operand.hbm [shape: bf16[2,16,16,16], index: 0, kind: input, shape index: {}]
  %s1 = inlined_call_operand.hbm [shape: bf16[2,4,16,16], index: 1, kind: input, shape index: {}]
  %s2 = inlined_call_operand.vmem [shape: bf16[16,4], index: 2, kind: input, shape index: {}]
  %s3 = inlined_call_operand.vmem [shape: f32[1,4], index: 3, kind: input, shape index: {}]
  %s4 = inlined_call_operand.vmem [shape: bf16[36,4], index: 4, kind: input, shape index: {}]
  %s5 = inlined_call_operand.vmem [shape: f32[1,4], index: 5, kind: input, shape index: {}]
  %s6 = inlined_call_operand.vmem [shape: bf16[4,16], index: 6, kind: input, shape index: {}]
  %s7 = inlined_call_operand.vmem [shape: f32[1,16], index: 7, kind: input, shape index: {}]
  %s8 = inlined_call_operand.hbm [shape: bf16[2,16,16,16], index: 8, kind: output, shape index: {}]
  %s9 = sld [smem:[#allocation0]]
  $region81: #{tpu_custom_call.1} parent=0
    _
  %s11 = ssub.s32 1, %s9
  %s12 = scalar_select 0, %s11, %s9
  $region1: #{tpu_custom_call.1} parent=0
    #allocation4 [shape = 'u8[65536]{0}', space=vmem, size = 0x10000, scoped, tag = 'input window, operand 0']
    #allocation5 [shape = 's32[2]{0}', space=sflag, size = 0x8, scoped, tag = 'scoped memory for tpu_custom_call.1']
    #allocation6 [shape = 's32[2]{0}', space=sflag, size = 0x8, scoped, tag = 'scoped memory for tpu_custom_call.1']
    #allocation7 [shape = 'u8[16384]{0}', space=vmem, size = 0x4000, scoped, tag = 'input window, operand 1']
    #allocation8 [shape = 's32[2]{0}', space=sflag, size = 0x8, scoped, tag = 'scoped memory for tpu_custom_call.1']
    #allocation9 [shape = 'u8[65536]{0}', space=vmem, size = 0x10000, scoped, tag = 'output window, operand 0']
    %13 = vsyncpa [#allocation5], 0
    %s14 = scalar_lea.sflag [#allocation5], 1
    %15 = vsyncpa %s14, 0
    %16 = vsyncpa [#allocation8], 0
    %s17 = scalar_lea.sflag [#allocation8], 1
    %18 = vsyncpa %s17, 0
    %19 = vsyncpa [#allocation6], 0
    %s20 = scalar_lea.sflag [#allocation6], 1
    %21 = vsyncpa %s20, 0
    loop: start=0, step=1, limit=6
    $region2: #{tpu_custom_call.1} parent=1 // loop_pre_header
      _
    $region3: #{tpu_custom_call.1} parent=1 // loop_header
      %s23 = sphi 0, %s27
      %p24 = scmp.ge.s32.totalorder %s23, 6
      %s30 = sphi 0, %s42
      %s31 = sphi 0, %s38
      %s32 = sphi 0, %s30
      %s33 = sphi 0, %s31
      %s34 = sphi 0, %s32
      %s35 = sphi 0, %s33
      %s47 = sphi 0, %s49
      %s50 = sphi 0, %s47
      %s51 = sphi 0, %s50
      %s67 = sphi 0, %s51
      %s75 = sphi 0, %s77
      %s78 = sphi 0, %s75
      %s79 = sphi 0, %s78
      %s95 = sphi 0, %s79
      %s99 = sphi 0, %s99
      %s101 = sphi 0, %s99
      %s102 = sphi 0, %s101
      %s116 = sphi 0, %s102
      %s120 = sphi 0, %s120
      %s122 = sphi 0, %s120
      %s123 = sphi 0, %s122
      %s137 = sphi 0, %s123
      %s141 = sphi 0, %s141
      %s143 = sphi 0, %s141
      %s144 = sphi 0, %s143
      %s158 = sphi 0, %s144
      %s162 = sphi 0, %s162
      %s164 = sphi 0, %s162
      %s165 = sphi 0, %s164
      %s179 = sphi 0, %s165
      %s183 = sphi 0, %s183
      %s185 = sphi 0, %s183
      %s186 = sphi 0, %s185
      %s200 = sphi 0, %s186
      %s204 = sphi 0, %s204
      %s206 = sphi 0, %s204
      %s207 = sphi 0, %s206
      %s221 = sphi 0, %s207
      %s229 = sphi 0, %s231
      %s232 = sphi 0, %s229
      %s233 = sphi 0, %s232
      %s249 = sphi 0, %s233
    $region4: #{tpu_custom_call.1} parent=1 // loop_header_branch
      %26 = sbr.rel (%p24) target = $region8
    $region5: #{tpu_custom_call.1} parent=1 // loop_body
      %s28 = ssub.s32 %s23, 1
      %s29 = ssub.s32 %s23, 2
      %s36 = sadd.s32 1, %s31
      %p37 = scmp.ge.s32.totalorder %s36, 2
      %s38 = scalar_select %p37, 0, %s36
      %s39 = sadd.s32 1, %s30
      %s40 = scalar_select %p37, %s39, %s30
      %p41 = scmp.ge.s32.totalorder %s40, 2
      %s42 = scalar_select %p41, 0, %s40
      %s43 = ssub.s32 %s30, %s42
      %s44 = ssub.s32 %s31, %s38
      %s45 = sor.u32 %s43, %s44
      %p46 = scmp.eq.s32.totalorder %s45, 0
      %s48 = sadd.s32 %s47, 1
      %s49 = scalar_select %p46, %s47, %s48
      %p52 = pneg %p46
      %p53 = scmp.eq.s32.totalorder %s23, 3
      %p54 = por %p52, %p53
      %p55 = scmp.ne.s32.totalorder %s47, %s50
      %p56 = scmp.eq.s32.totalorder %s23, 0
      %p57 = por %p55, %p56
      %p58 = scmp.ne.s32.totalorder %s47, %s50
      %p59 = scmp.eq.s32.totalorder %s28, 3
      %p60 = por %p58, %p59
      %p61 = scmp.ne.s32.totalorder %s50, %s51
      %p62 = scmp.eq.s32.totalorder %s28, 0
      %p63 = por %p61, %p62
      %p64 = scmp.ne.s32.totalorder %s50, %s51
      %p65 = scmp.eq.s32.totalorder %s29, 3
      %p66 = por %p64, %p65
      %p68 = scmp.ne.s32.totalorder %s51, %s67
      %p69 = scmp.eq.s32.totalorder %s29, 0
      %p70 = por %p68, %p69
      %s71 = ssub.s32 %s30, %s42
      %s72 = ssub.s32 %s31, %s38
      %s73 = sor.u32 %s71, %s72
      %p74 = scmp.eq.s32.totalorder %s73, 0
      %s76 = sadd.s32 %s75, 1
      %s77 = scalar_select %p74, %s75, %s76
      %p80 = pneg %p74
      %p81 = scmp.eq.s32.totalorder %s23, 3
      %p82 = por %p80, %p81
      %p83 = scmp.ne.s32.totalorder %s75, %s78
      %p84 = scmp.eq.s32.totalorder %s23, 0
      %p85 = por %p83, %p84
      %p86 = scmp.ne.s32.totalorder %s75, %s78
      %p87 = scmp.eq.s32.totalorder %s28, 3
      %p88 = por %p86, %p87
      %p89 = scmp.ne.s32.totalorder %s78, %s79
      %p90 = scmp.eq.s32.totalorder %s28, 0
      %p91 = por %p89, %p90
      %p92 = scmp.ne.s32.totalorder %s78, %s79
      %p93 = scmp.eq.s32.totalorder %s29, 3
      %p94 = por %p92, %p93
      %p96 = scmp.ne.s32.totalorder %s79, %s95
      %p97 = scmp.eq.s32.totalorder %s29, 0
      %p98 = por %p96, %p97
      %s100 = sadd.s32 %s99, 1
      %p103 = scmp.eq.s32.totalorder %s23, 3
      %p104 = scmp.ne.s32.totalorder %s99, %s101
      %p105 = scmp.eq.s32.totalorder %s23, 0
      %p106 = por %p104, %p105
      %p107 = scmp.ne.s32.totalorder %s99, %s101
      %p108 = scmp.eq.s32.totalorder %s28, 3
      %p109 = por %p107, %p108
      %p110 = scmp.ne.s32.totalorder %s101, %s102
      %p111 = scmp.eq.s32.totalorder %s28, 0
      %p112 = por %p110, %p111
      %p113 = scmp.ne.s32.totalorder %s101, %s102
      %p114 = scmp.eq.s32.totalorder %s29, 3
      %p115 = por %p113, %p114
      %p117 = scmp.ne.s32.totalorder %s102, %s116
      %p118 = scmp.eq.s32.totalorder %s29, 0
      %p119 = por %p117, %p118
      %s121 = sadd.s32 %s120, 1
      %p124 = scmp.eq.s32.totalorder %s23, 3
      %p125 = scmp.ne.s32.totalorder %s120, %s122
      %p126 = scmp.eq.s32.totalorder %s23, 0
      %p127 = por %p125, %p126
      %p128 = scmp.ne.s32.totalorder %s120, %s122
      %p129 = scmp.eq.s32.totalorder %s28, 3
      %p130 = por %p128, %p129
      %p131 = scmp.ne.s32.totalorder %s122, %s123
      %p132 = scmp.eq.s32.totalorder %s28, 0
      %p133 = por %p131, %p132
      %p134 = scmp.ne.s32.totalorder %s122, %s123
      %p135 = scmp.eq.s32.totalorder %s29, 3
      %p136 = por %p134, %p135
      %p138 = scmp.ne.s32.totalorder %s123, %s137
      %p139 = scmp.eq.s32.totalorder %s29, 0
      %p140 = por %p138, %p139
      %s142 = sadd.s32 %s141, 1
      %p145 = scmp.eq.s32.totalorder %s23, 3
      %p146 = scmp.ne.s32.totalorder %s141, %s143
      %p147 = scmp.eq.s32.totalorder %s23, 0
      %p148 = por %p146, %p147
      %p149 = scmp.ne.s32.totalorder %s141, %s143
      %p150 = scmp.eq.s32.totalorder %s28, 3
      %p151 = por %p149, %p150
      %p152 = scmp.ne.s32.totalorder %s143, %s144
      %p153 = scmp.eq.s32.totalorder %s28, 0
      %p154 = por %p152, %p153
      %p155 = scmp.ne.s32.totalorder %s143, %s144
      %p156 = scmp.eq.s32.totalorder %s29, 3
      %p157 = por %p155, %p156
      %p159 = scmp.ne.s32.totalorder %s144, %s158
      %p160 = scmp.eq.s32.totalorder %s29, 0
      %p161 = por %p159, %p160
      %s163 = sadd.s32 %s162, 1
      %p166 = scmp.eq.s32.totalorder %s23, 3
      %p167 = scmp.ne.s32.totalorder %s162, %s164
      %p168 = scmp.eq.s32.totalorder %s23, 0
      %p169 = por %p167, %p168
      %p170 = scmp.ne.s32.totalorder %s162, %s164
      %p171 = scmp.eq.s32.totalorder %s28, 3
      %p172 = por %p170, %p171
      %p173 = scmp.ne.s32.totalorder %s164, %s165
      %p174 = scmp.eq.s32.totalorder %s28, 0
      %p175 = por %p173, %p174
      %p176 = scmp.ne.s32.totalorder %s164, %s165
      %p177 = scmp.eq.s32.totalorder %s29, 3
      %p178 = por %p176, %p177
      %p180 = scmp.ne.s32.totalorder %s165, %s179
      %p181 = scmp.eq.s32.totalorder %s29, 0
      %p182 = por %p180, %p181
      %s184 = sadd.s32 %s183, 1
      %p187 = scmp.eq.s32.totalorder %s23, 3
      %p188 = scmp.ne.s32.totalorder %s183, %s185
      %p189 = scmp.eq.s32.totalorder %s23, 0
      %p190 = por %p188, %p189
      %p191 = scmp.ne.s32.totalorder %s183, %s185
      %p192 = scmp.eq.s32.totalorder %s28, 3
      %p193 = por %p191, %p192
      %p194 = scmp.ne.s32.totalorder %s185, %s186
      %p195 = scmp.eq.s32.totalorder %s28, 0
      %p196 = por %p194, %p195
      %p197 = scmp.ne.s32.totalorder %s185, %s186
      %p198 = scmp.eq.s32.totalorder %s29, 3
      %p199 = por %p197, %p198
      %p201 = scmp.ne.s32.totalorder %s186, %s200
      %p202 = scmp.eq.s32.totalorder %s29, 0
      %p203 = por %p201, %p202
      %s205 = sadd.s32 %s204, 1
      %p208 = scmp.eq.s32.totalorder %s23, 3
      %p209 = scmp.ne.s32.totalorder %s204, %s206
      %p210 = scmp.eq.s32.totalorder %s23, 0
      %p211 = por %p209, %p210
      %p212 = scmp.ne.s32.totalorder %s204, %s206
      %p213 = scmp.eq.s32.totalorder %s28, 3
      %p214 = por %p212, %p213
      %p215 = scmp.ne.s32.totalorder %s206, %s207
      %p216 = scmp.eq.s32.totalorder %s28, 0
      %p217 = por %p215, %p216
      %p218 = scmp.ne.s32.totalorder %s206, %s207
      %p219 = scmp.eq.s32.totalorder %s29, 3
      %p220 = por %p218, %p219
      %p222 = scmp.ne.s32.totalorder %s207, %s221
      %p223 = scmp.eq.s32.totalorder %s29, 0
      %p224 = por %p222, %p223
      %s225 = ssub.s32 %s30, %s42
      %s226 = ssub.s32 %s31, %s38
      %s227 = sor.u32 %s225, %s226
      %p228 = scmp.eq.s32.totalorder %s227, 0
      %s230 = sadd.s32 %s229, 1
      %s231 = scalar_select %p228, %s229, %s230
      %p234 = pneg %p228
      %p235 = scmp.eq.s32.totalorder %s23, 3
      %p236 = por %p234, %p235
      %p237 = scmp.ne.s32.totalorder %s229, %s232
      %p238 = scmp.eq.s32.totalorder %s23, 0
      %p239 = por %p237, %p238
      %p240 = scmp.ne.s32.totalorder %s229, %s232
      %p241 = scmp.eq.s32.totalorder %s28, 3
      %p242 = por %p240, %p241
      %p243 = scmp.ne.s32.totalorder %s232, %s233
      %p244 = scmp.eq.s32.totalorder %s28, 0
      %p245 = por %p243, %p244
      %p246 = scmp.ne.s32.totalorder %s232, %s233
      %p247 = scmp.eq.s32.totalorder %s29, 3
      %p248 = por %p246, %p247
      %p250 = scmp.ne.s32.totalorder %s233, %s249
      %p251 = scmp.eq.s32.totalorder %s29, 0
      %p252 = por %p250, %p251
      %p253 = scmp.le.s32.totalorder 1, %s23
      %p254 = scmp.lt.s32.totalorder %s23, 5
      %p255 = pnand %p253, %p254
      %p256 = pneg %p255
      // Predicated region
      $region9: #{tpu_custom_call.1} parent=5 // pred_check
        _
      $region10: #{tpu_custom_call.1} parent=5 // pred_check_branch
        %258 = sbr.rel (%p255) target = $region12
      $region11: #{tpu_custom_call.1} parent=5 // pred_region
        %s259 = ssub.s32 %s23, 1
        // Predicated region
        $region13: #{tpu_custom_call.1} parent=11 // pred_check
          %p260 = pneg %p112
        $region14: #{tpu_custom_call.1} parent=11 // pred_check_branch
          %262 = sbr.rel (%p260) target = $region16
        $region15: #{tpu_custom_call.1} parent=11 // pred_region
          _
        $region16: #{tpu_custom_call.1} parent=11 // pred_fallthru
          _
        // Predicated region
        $region17: #{tpu_custom_call.1} parent=11 // pred_check
          %p263 = pneg %p133
        $region18: #{tpu_custom_call.1} parent=11 // pred_check_branch
          %265 = sbr.rel (%p263) target = $region20
        $region19: #{tpu_custom_call.1} parent=11 // pred_region
          _
        $region20: #{tpu_custom_call.1} parent=11 // pred_fallthru
          _
        // Predicated region
        $region21: #{tpu_custom_call.1} parent=11 // pred_check
          %p266 = pneg %p154
        $region22: #{tpu_custom_call.1} parent=11 // pred_check_branch
          %268 = sbr.rel (%p266) target = $region24
        $region23: #{tpu_custom_call.1} parent=11 // pred_region
          _
        $region24: #{tpu_custom_call.1} parent=11 // pred_fallthru
          _
        // Predicated region
        $region25: #{tpu_custom_call.1} parent=11 // pred_check
          %p269 = pneg %p175
        $region26: #{tpu_custom_call.1} parent=11 // pred_check_branch
          %271 = sbr.rel (%p269) target = $region28
        $region27: #{tpu_custom_call.1} parent=11 // pred_region
          _
        $region28: #{tpu_custom_call.1} parent=11 // pred_fallthru
          _
        // Predicated region
        $region29: #{tpu_custom_call.1} parent=11 // pred_check
          %p272 = pneg %p196
        $region30: #{tpu_custom_call.1} parent=11 // pred_check_branch
          %274 = sbr.rel (%p272) target = $region32
        $region31: #{tpu_custom_call.1} parent=11 // pred_region
          _
        $region32: #{tpu_custom_call.1} parent=11 // pred_fallthru
          _
        // Predicated region
        $region33: #{tpu_custom_call.1} parent=11 // pred_check
          %p275 = pneg %p217
        $region34: #{tpu_custom_call.1} parent=11 // pred_check_branch
          %277 = sbr.rel (%p275) target = $region36
        $region35: #{tpu_custom_call.1} parent=11 // pred_region
          _
        $region36: #{tpu_custom_call.1} parent=11 // pred_fallthru
          _
      $region12: #{tpu_custom_call.1} parent=5 // pred_fallthru
        _
      %p278 = scmp.lt.s32.totalorder %s23, 4
      // Predicated region
      $region37: #{tpu_custom_call.1} parent=5 // pred_check
        %p279 = pneg %p278
      $region38: #{tpu_custom_call.1} parent=5 // pred_check_branch
        %281 = sbr.rel (%p279) target = $region40
      $region39: #{tpu_custom_call.1} parent=5 // pred_region
        // Predicated region
        $region41: #{tpu_custom_call.1} parent=39 // pred_check
          %p282 = pneg %p57
        $region42: #{tpu_custom_call.1} parent=39 // pred_check_branch
          %284 = sbr.rel (%p282) target = $region44
        $region43: #{tpu_custom_call.1} parent=39 // pred_region
          %s285 = sand.u32 %s47, 1
          %s286 = scalar_lea.sflag [#allocation5], %s285
          %s287 = sand.u32 %s47, 1
          %s288 = smul.addr %s287, 64
          %s289 = scalar_lea.vmem [#allocation4], %s288
          %s290 = smul.u32 8, %s31
          %s292 = ssub.s32 1024, 1024
          %293 = vsyncadd %s286, %s292
          %s294 = smul.addr %s290, 2
          %s295 = smul.addr %s30, 32
          %s296 = sadd.s32 %s294, %s295
          %s297 = smul.addr %s296, 64
          %s298 = scalar_lea.hbm %s0, %s297
          %s299 = sshll.u32 %s289, 4
          %s300 = int_to_ptr.vmem [resolvable:$true] %s299
          %305 = dma.hbm_to_vmem [thread:$0]  %s298, 1024, %s300, %s286, 64, 64, 4
        $region44: #{tpu_custom_call.1} parent=39 // pred_fallthru
          _
        // Predicated region
        $region45: #{tpu_custom_call.1} parent=39 // pred_check
          %p306 = pneg %p85
        $region46: #{tpu_custom_call.1} parent=39 // pred_check_branch
          %308 = sbr.rel (%p306) target = $region48
        $region47: #{tpu_custom_call.1} parent=39 // pred_region
          %s309 = sand.u32 %s75, 1
          %s310 = scalar_lea.sflag [#allocation8], %s309
          %s311 = sand.u32 %s75, 1
          %s312 = smul.addr %s311, 16
          %s313 = scalar_lea.vmem [#allocation7], %s312
          %s314 = smul.u32 2, %s31
          %s316 = ssub.s32 256, 256
          %317 = vsyncadd %s310, %s316
          %s318 = smul.addr %s314, 2
          %s319 = smul.addr %s30, 8
          %s320 = sadd.s32 %s318, %s319
          %s321 = smul.addr %s320, 64
          %s322 = scalar_lea.hbm %s1, %s321
          %s323 = sshll.u32 %s313, 4
          %s324 = int_to_ptr.vmem [resolvable:$true] %s323
          %329 = dma.hbm_to_vmem [thread:$0]  %s322, 256, %s324, %s310, 64, 64, 4
        $region48: #{tpu_custom_call.1} parent=39 // pred_fallthru
          _
      $region40: #{tpu_custom_call.1} parent=5 // pred_fallthru
        _
      %p330 = scmp.le.s32.totalorder 1, %s23
      %p331 = scmp.lt.s32.totalorder %s23, 5
      %p332 = pnand %p330, %p331
      %p333 = pneg %p332
      // Predicated region
      $region49: #{tpu_custom_call.1} parent=5 // pred_check
        _
      $region50: #{tpu_custom_call.1} parent=5 // pred_check_branch
        %335 = sbr.rel (%p332) target = $region52
      $region51: #{tpu_custom_call.1} parent=5 // pred_region
        %s336 = ssub.s32 %s23, 1
        %s337 = sand.u32 %s50, 1
        %s338 = scalar_lea.sflag [#allocation5], %s337
        %s339 = sand.u32 %s50, 1
        %s340 = smul.addr %s339, 64
        %s341 = scalar_lea.vmem [#allocation4], %s340
        // Predicated region
        $region53: #{tpu_custom_call.1} parent=51 // pred_check
          %p342 = pneg %p63
        $region54: #{tpu_custom_call.1} parent=51 // pred_check_branch
          %344 = sbr.rel (%p342) target = $region56
        $region55: #{tpu_custom_call.1} parent=51 // pred_region
          %345 = dma.done %s338, 1024
        $region56: #{tpu_custom_call.1} parent=51 // pred_fallthru
          _
        %s346 = sand.u32 %s78, 1
        %s347 = scalar_lea.sflag [#allocation8], %s346
        %s348 = sand.u32 %s78, 1
        %s349 = smul.addr %s348, 16
        %s350 = scalar_lea.vmem [#allocation7], %s349
        // Predicated region
        $region57: #{tpu_custom_call.1} parent=51 // pred_check
          %p351 = pneg %p91
        $region58: #{tpu_custom_call.1} parent=51 // pred_check_branch
          %353 = sbr.rel (%p351) target = $region60
        $region59: #{tpu_custom_call.1} parent=51 // pred_region
          %354 = dma.done %s347, 256
        $region60: #{tpu_custom_call.1} parent=51 // pred_fallthru
          _
        %s355 = sand.u32 %s50, 1
        %s356 = scalar_lea.sflag [#allocation5], %s355
        %s357 = sand.u32 %s50, 1
        %s358 = smul.addr %s357, 64
        %s359 = scalar_lea.vmem [#allocation4], %s358
        %p360 = pneg %p63
        %p361 = pneg %p60
        %s362 = sand.u32 %s78, 1
        %s363 = scalar_lea.sflag [#allocation8], %s362
        %s364 = sand.u32 %s78, 1
        %s365 = smul.addr %s364, 16
        %s366 = scalar_lea.vmem [#allocation7], %s365
        %p367 = pneg %p91
        %p368 = pneg %p88
        %p369 = pneg %p112
        %p370 = pneg %p109
        %p371 = pneg %p133
        %p372 = pneg %p130
        %p373 = pneg %p154
        %p374 = pneg %p151
        %p375 = pneg %p175
        %p376 = pneg %p172
        %p377 = pneg %p196
        %p378 = pneg %p193
        %p379 = pneg %p217
        %p380 = pneg %p214
        %p381 = pneg %p245
        %p382 = pneg %p242
        %s383 = sand.u32 %s232, 1
        %s384 = scalar_lea.sflag [#allocation6], %s383
        %s385 = sand.u32 %s232, 1
        %s386 = smul.addr %s385, 64
        %s387 = scalar_lea.vmem [#allocation9], %s386
        %s388 = smul.u32 8, %s33
        %s389 = smul.u32 2, %s33
        %s390 = smul.u32 8, %s33
        %v392 = vld [vmem:[%s341] sm:$0xf]
        %v393 = vld [vmem:[%s341 + $0x4] sm:$0xf]
        %v394 = vld [vmem:[%s341 + $0x8] sm:$0xf]
        %v395 = vld [vmem:[%s341 + $0xc] sm:$0xf]
        %v396 = vld [vmem:[%s341 + $0x10] sm:$0xf]
        %v397 = vld [vmem:[%s341 + $0x14] sm:$0xf]
        %v398 = vld [vmem:[%s341 + $0x18] sm:$0xf]
        %v399 = vld [vmem:[%s341 + $0x1c] sm:$0xf]
        %v400 = vld [vmem:[%s341 + $0x20] sm:$0xf]
        %v401 = vld [vmem:[%s341 + $0x24] sm:$0xf]
        %v402 = vld [vmem:[%s341 + $0x28] sm:$0xf]
        %v403 = vld [vmem:[%s341 + $0x2c] sm:$0xf]
        %v404 = vld [vmem:[%s341 + $0x30] sm:$0xf]
        %v405 = vld [vmem:[%s341 + $0x34] sm:$0xf]
        %v406 = vld [vmem:[%s341 + $0x38] sm:$0xf]
        %v407 = vld [vmem:[%s341 + $0x3c] sm:$0xf]
        %v408 = vld [vmem:[%s350] sm:$0xf]
        %v409 = vld [vmem:[%s350 + $0x4] sm:$0xf]
        %v410 = vld [vmem:[%s350 + $0x8] sm:$0xf]
        %v411 = vld [vmem:[%s350 + $0xc] sm:$0xf]
        %v412 = vld [vmem:[%s2] sm:$0xf]
        %v413 = vld [vmem:[%s2 + $0x4] sm:$0xf]
        %v414 = vld [vmem:[%s3] sm:$0x1]
        %v416 = vlaneseq
        %v417 = vshrl.u32 %v416, 7
        %v418 = vsub.s32 0, %v417
        %v419 = vrot.slane %v414, %v418
        %v437 = vunpack.c.l.b16 %v392
        %v438 = vunpack.c.l.b16 %v393
        %v439 = vunpack.c.l.b16 %v394
        %v440 = vunpack.c.l.b16 %v395
        %v441 = vunpack.c.l.b16 %v396
        %v442 = vunpack.c.l.b16 %v397
        %v443 = vunpack.c.l.b16 %v398
        %v444 = vunpack.c.l.b16 %v399
        %v445 = vunpack.c.l.b16 %v400
        %v446 = vunpack.c.l.b16 %v401
        %v447 = vunpack.c.l.b16 %v402
        %v448 = vunpack.c.l.b16 %v403
        %v449 = vunpack.c.l.b16 %v404
        %v450 = vunpack.c.l.b16 %v405
        %v451 = vunpack.c.l.b16 %v406
        %v452 = vunpack.c.l.b16 %v407
        %v453 = vpack.c.b16 %v438, %v437
        %v454 = vpack.c.b16 %v440, %v439
        %v455 = vpack.c.b16 %v442, %v441
        %v456 = vpack.c.b16 %v444, %v443
        %v457 = vpack.c.b16 %v446, %v445
        %v458 = vpack.c.b16 %v448, %v447
        %v459 = vpack.c.b16 %v450, %v449
        %v460 = vpack.c.b16 %v452, %v451
        %v463 = vunpack.c.l.b16 %v412
        %v464 = vunpack.c.l.b16 %v413
        %v465 = vpack.c.b16 %v464, %v463
        %vm467 = vcmask 130048
        %v469 = vsel %vm467, %v453, 0
        %v472 = vsel %vm467, %v454, 0
        %v475 = vsel %vm467, %v455, 0
        %v478 = vsel %vm467, %v456, 0
        %v481 = vsel %vm467, %v457, 0
        %v484 = vsel %vm467, %v458, 0
        %v487 = vsel %vm467, %v459, 0
        %v490 = vsel %vm467, %v460, 0
        %492 = vmatprep.subr.bf16.mxu0 0
        %493 = vmatpush1.bf16.msra.mxu0 0
        %494 = vmatprep.subr.bf16.mxu0 0
        %495 = vmatpush1.bf16.msra.mxu0 0
        %496 = vmatprep.subr.bf16.mxu0 0
        %497 = vmatpush1.bf16.msra.mxu0 0
        %498 = vmatprep.subr.bf16.mxu0 0
        %499 = vmatpush1.bf16.msra.mxu0 0
        %500 = vmatprep.subr.bf16.mxu0 0
        %501 = vmatpush1.bf16.msra.mxu0 0
        %502 = vmatprep.subr.bf16.mxu0 0
        %503 = vmatpush1.bf16.msra.mxu0 0
        %504 = vmatprep.subr.bf16.mxu0 0
        %505 = vmatpush1.bf16.msra.mxu0 0
        %506 = vmatprep.subr.bf16.mxu0 0
        %507 = vmatpush1.bf16.msra.mxu0 %v465
        %508 = vmatprep.subr.bf16.mxu0 0
        %509 = vmatpush2.bf16.msra.mxu0 0
        %510 = vmatprep.subr.bf16.mxu0 0
        %511 = vmatpush2.bf16.msra.mxu0 0
        %512 = vmatprep.subr.bf16.mxu0 0
        %513 = vmatpush2.bf16.msra.mxu0 0
        %514 = vmatprep.subr.bf16.mxu0 0
        %515 = vmatpush2.bf16.msra.mxu0 0
        %516 = vmatprep.subr.bf16.mxu0 0
        %517 = vmatpush2.bf16.msra.mxu0 0
        %518 = vmatprep.subr.bf16.mxu0 0
        %519 = vmatpush2.bf16.msra.mxu0 0
        %520 = vmatprep.subr.bf16.mxu0 0
        %521 = vmatpush2.bf16.msra.mxu0 0
        %522 = vmatprep.subr.bf16.mxu0 0
        %523 = vmatpush2.bf16.msra.mxu0 0
        %524 = vmatprep.mubr.bf16.mxu0 0
        %525 = vmatmul.mubr.bf16.gmra.mxu0 %v469
        %v526 = vpop.f32.mrf.mxu0
        %v527 = vadd.f32 %v419, %v526
        %v528 = vpop.f32.mrf.mxu0
        %v529 = vpop.f32.mrf.mxu0
        %v530 = vadd.f32 %v419, %v529
        %v531 = vpop.f32.mrf.mxu0
        %532 = vmatprep.mubr.bf16.mxu0 0
        %533 = vmatmul.mubr.bf16.gmra.mxu0 %v472
        %v534 = vpop.f32.mrf.mxu0
        %v535 = vadd.f32 %v419, %v534
        %v536 = vpop.f32.mrf.mxu0
        %v537 = vpop.f32.mrf.mxu0
        %v538 = vadd.f32 %v419, %v537
        %v539 = vpop.f32.mrf.mxu0
        %540 = vmatprep.mubr.bf16.mxu0 0
        %541 = vmatmul.mubr.bf16.gmra.mxu0 %v475
        %v542 = vpop.f32.mrf.mxu0
        %v543 = vadd.f32 %v419, %v542
        %v544 = vpop.f32.mrf.mxu0
        %v545 = vpop.f32.mrf.mxu0
        %v546 = vadd.f32 %v419, %v545
        %v547 = vpop.f32.mrf.mxu0
        %548 = vmatprep.mubr.bf16.mxu0 0
        %549 = vmatmul.mubr.bf16.gmra.mxu0 %v478
        %v550 = vpop.f32.mrf.mxu0
        %v551 = vadd.f32 %v419, %v550
        %v552 = vpop.f32.mrf.mxu0
        %v553 = vpop.f32.mrf.mxu0
        %v554 = vadd.f32 %v419, %v553
        %v555 = vpop.f32.mrf.mxu0
        %556 = vmatprep.mubr.bf16.mxu0 0
        %557 = vmatmul.mubr.bf16.gmra.mxu0 %v481
        %v558 = vpop.f32.mrf.mxu0
        %v559 = vadd.f32 %v419, %v558
        %v560 = vpop.f32.mrf.mxu0
        %v561 = vpop.f32.mrf.mxu0
        %v562 = vadd.f32 %v419, %v561
        %v563 = vpop.f32.mrf.mxu0
        %564 = vmatprep.mubr.bf16.mxu0 0
        %565 = vmatmul.mubr.bf16.gmra.mxu0 %v484
        %v566 = vpop.f32.mrf.mxu0
        %v567 = vadd.f32 %v419, %v566
        %v568 = vpop.f32.mrf.mxu0
        %v569 = vpop.f32.mrf.mxu0
        %v570 = vadd.f32 %v419, %v569
        %v571 = vpop.f32.mrf.mxu0
        %572 = vmatprep.mubr.bf16.mxu0 0
        %573 = vmatmul.mubr.bf16.gmra.mxu0 %v487
        %v574 = vpop.f32.mrf.mxu0
        %v575 = vadd.f32 %v419, %v574
        %v576 = vpop.f32.mrf.mxu0
        %v577 = vpop.f32.mrf.mxu0
        %v578 = vadd.f32 %v419, %v577
        %v579 = vpop.f32.mrf.mxu0
        %580 = vmatprep.mubr.bf16.mxu0 0
        %581 = vmatmul.mubr.bf16.gmra.mxu0 %v490
        %v582 = vpop.f32.mrf.mxu0
        %v583 = vadd.f32 %v419, %v582
        %v584 = vpop.f32.mrf.mxu0
        %v585 = vpop.f32.mrf.mxu0
        %v586 = vadd.f32 %v419, %v585
        %v587 = vpop.f32.mrf.mxu0
        %588 = vdwg.mxu0
        %v589 = vmax.f32 %v527, 0.0
        %v590 = vmax.f32 %v530, 0.0
        %v591 = vmax.f32 %v535, 0.0
        %v592 = vmax.f32 %v538, 0.0
        %v593 = vmax.f32 %v543, 0.0
        %v594 = vmax.f32 %v546, 0.0
        %v595 = vmax.f32 %v551, 0.0
        %v596 = vmax.f32 %v554, 0.0
        %v597 = vmax.f32 %v559, 0.0
        %v598 = vmax.f32 %v562, 0.0
        %v599 = vmax.f32 %v567, 0.0
        %v600 = vmax.f32 %v570, 0.0
        %v601 = vmax.f32 %v575, 0.0
        %v602 = vmax.f32 %v578, 0.0
        %v603 = vmax.f32 %v583, 0.0
        %v604 = vmax.f32 %v586, 0.0
        %v605 = vpack.c.bf16 %v590, %v589
        %v606 = vpack.c.bf16 %v592, %v591
        %v607 = vpack.c.bf16 %v594, %v593
        %v608 = vpack.c.bf16 %v596, %v595
        %v609 = vpack.c.bf16 %v598, %v597
        %v610 = vpack.c.bf16 %v600, %v599
        %v611 = vpack.c.bf16 %v602, %v601
        %v612 = vpack.c.bf16 %v604, %v603
        %v617 = vunpack.c.l.b16 %v408
        %v618 = vunpack.c.l.b16 %v409
        %v619 = vunpack.c.l.b16 %v410
        %v620 = vunpack.c.l.b16 %v411
        %v621 = vpack.c.b16 %v618, %v617
        %v622 = vpack.c.b16 %v620, %v619
        %v624 = vsel %vm467, %v621, 0
        %v627 = vsel %vm467, %v622, 0
        %629 = vmatprep.subr.bf16.mxu0 0
        %630 = vmatpush1.bf16.msra.mxu0 0
        %631 = vmatprep.subr.bf16.mxu0 0
        %632 = vmatpush1.bf16.msra.mxu0 0
        %633 = vmatprep.subr.bf16.mxu0 0
        %634 = vmatpush1.bf16.msra.mxu0 0
        %635 = vmatprep.subr.bf16.mxu0 0
        %636 = vmatpush1.bf16.msra.mxu0 0
        %637 = vmatprep.subr.bf16.mxu0 0
        %638 = vmatpush1.bf16.msra.mxu0 0
        %639 = vmatprep.subr.bf16.mxu0 0
        %640 = vmatpush1.bf16.msra.mxu0 0
        %641 = vmatprep.subr.bf16.mxu0 0
        %642 = vmatpush1.bf16.msra.mxu0 0
        %643 = vmatprep.subr.bf16.mxu0 0
        %644 = vmatpush1.bf16.msra.mxu0 %v465
        %645 = vmatprep.subr.bf16.mxu0 0
        %646 = vmatpush2.bf16.msra.mxu0 0
        %647 = vmatprep.subr.bf16.mxu0 0
        %648 = vmatpush2.bf16.msra.mxu0 0
        %649 = vmatprep.subr.bf16.mxu0 0
        %650 = vmatpush2.bf16.msra.mxu0 0
        %651 = vmatprep.subr.bf16.mxu0 0
        %652 = vmatpush2.bf16.msra.mxu0 0
        %653 = vmatprep.subr.bf16.mxu0 0
        %654 = vmatpush2.bf16.msra.mxu0 0
        %655 = vmatprep.subr.bf16.mxu0 0
        %656 = vmatpush2.bf16.msra.mxu0 0
        %657 = vmatprep.subr.bf16.mxu0 0
        %658 = vmatpush2.bf16.msra.mxu0 0
        %659 = vmatprep.subr.bf16.mxu0 0
        %660 = vmatpush2.bf16.msra.mxu0 0
        %661 = vmatprep.mubr.bf16.mxu0 0
        %662 = vmatmul.mubr.bf16.gmra.mxu0 %v624
        %v663 = vpop.f32.mrf.mxu0
        %v664 = vadd.f32 %v419, %v663
        %v665 = vpop.f32.mrf.mxu0
        %v666 = vpop.f32.mrf.mxu0
        %v667 = vadd.f32 %v419, %v666
        %v668 = vpop.f32.mrf.mxu0
        %669 = vmatprep.mubr.bf16.mxu0 0
        %670 = vmatmul.mubr.bf16.gmra.mxu0 %v627
        %v671 = vpop.f32.mrf.mxu0
        %v672 = vadd.f32 %v419, %v671
        %v673 = vpop.f32.mrf.mxu0
        %v674 = vpop.f32.mrf.mxu0
        %v675 = vadd.f32 %v419, %v674
        %v676 = vpop.f32.mrf.mxu0
        %677 = vdwg.mxu0
        %v678 = vmax.f32 %v664, 0.0
        %v679 = vmax.f32 %v667, 0.0
        %v680 = vmax.f32 %v672, 0.0
        %v681 = vmax.f32 %v675, 0.0
        %v682 = vpack.c.bf16 %v679, %v678
        %v683 = vpack.c.bf16 %v681, %v680
        %vm684 = vcmask 24576
        %vm685 = vsmask.f32 256
        %vm686 = vmand %vm684, %vm685
        %v687 = vld [vmem:[#allocation2] sm:$0x1]
        %v688 = vsel %vm686, 0, %v687
        %689 = vst [vmem:[#allocation2] sm:$0x1] %v688
        %v690 = vld [vmem:[#allocation2 + $0xc] sm:$0x1]
        %v691 = vsel %vm686, 0, %v690
        %692 = vst [vmem:[#allocation2 + $0xc] sm:$0x1] %v691
        %v693 = vld [vmem:[#allocation2 + $0x18] sm:$0x1]
        %v694 = vsel %vm686, 0, %v693
        %695 = vst [vmem:[#allocation2 + $0x18] sm:$0x1] %v694
        %v696 = vld [vmem:[#allocation2 + $0x24] sm:$0x1]
        %v697 = vsel %vm686, 0, %v696
        %698 = vst [vmem:[#allocation2 + $0x24] sm:$0x1] %v697
        %v699 = vld [vmem:[#allocation2 + $0x30] sm:$0x1]
        %v700 = vsel %vm686, 0, %v699
        %701 = vst [vmem:[#allocation2 + $0x30] sm:$0x1] %v700
        %v702 = vld [vmem:[#allocation2 + $0x3c] sm:$0x1]
        %v703 = vsel %vm686, 0, %v702
        %704 = vst [vmem:[#allocation2 + $0x3c] sm:$0x1] %v703
        %v705 = vld [vmem:[#allocation2 + $0x48] sm:$0x1]
        %v706 = vsel %vm686, 0, %v705
        %707 = vst [vmem:[#allocation2 + $0x48] sm:$0x1] %v706
        %v708 = vld [vmem:[#allocation2 + $0x54] sm:$0x1]
        %v709 = vsel %vm686, 0, %v708
        %710 = vst [vmem:[#allocation2 + $0x54] sm:$0x1] %v709
        %v711 = vld [vmem:[#allocation2 + $0x60] sm:$0x1]
        %v712 = vsel %vm686, 0, %v711
        %713 = vst [vmem:[#allocation2 + $0x60] sm:$0x1] %v712
        %v714 = vld [vmem:[#allocation2 + $0x6c] sm:$0x1]
        %v715 = vsel %vm686, 0, %v714
        %716 = vst [vmem:[#allocation2 + $0x6c] sm:$0x1] %v715
        %vm717 = vsmask.f32 7938
        %vm718 = vmand %vm684, %vm717
        %v719 = vld [vmem:[#allocation2 + $0x8] sm:$0x1]
        %v720 = vsel %vm718, 0, %v719
        %721 = vst [vmem:[#allocation2 + $0x8] sm:$0x1] %v720
        %v722 = vld [vmem:[#allocation2 + $0x14] sm:$0x1]
        %v723 = vsel %vm718, 0, %v722
        %724 = vst [vmem:[#allocation2 + $0x14] sm:$0x1] %v723
        %v725 = vld [vmem:[#allocation2 + $0x20] sm:$0x1]
        %v726 = vsel %vm718, 0, %v725
        %727 = vst [vmem:[#allocation2 + $0x20] sm:$0x1] %v726
        %v728 = vld [vmem:[#allocation2 + $0x2c] sm:$0x1]
        %v729 = vsel %vm718, 0, %v728
        %730 = vst [vmem:[#allocation2 + $0x2c] sm:$0x1] %v729
        %v731 = vld [vmem:[#allocation2 + $0x38] sm:$0x1]
        %v732 = vsel %vm718, 0, %v731
        %733 = vst [vmem:[#allocation2 + $0x38] sm:$0x1] %v732
        %v734 = vld [vmem:[#allocation2 + $0x44] sm:$0x1]
        %v735 = vsel %vm718, 0, %v734
        %736 = vst [vmem:[#allocation2 + $0x44] sm:$0x1] %v735
        %v737 = vld [vmem:[#allocation2 + $0x50] sm:$0x1]
        %v738 = vsel %vm718, 0, %v737
        %739 = vst [vmem:[#allocation2 + $0x50] sm:$0x1] %v738
        %v740 = vld [vmem:[#allocation2 + $0x5c] sm:$0x1]
        %v741 = vsel %vm718, 0, %v740
        %742 = vst [vmem:[#allocation2 + $0x5c] sm:$0x1] %v741
        %v743 = vld [vmem:[#allocation2 + $0x68] sm:$0x1]
        %v744 = vsel %vm718, 0, %v743
        %745 = vst [vmem:[#allocation2 + $0x68] sm:$0x1] %v744
        %v746 = vld [vmem:[#allocation2 + $0x74] sm:$0x1]
        %v747 = vsel %vm718, 0, %v746
        %748 = vst [vmem:[#allocation2 + $0x74] sm:$0x1] %v747
        %v750 = vunpack.c.l.b16 %v682
        %v751 = vunpack.c.h.b16 %v682
        %v752 = vpack.c.b16 %v750, %v750
        %v753 = vpack.c.b16 %v751, %v751
        %vm754 = vsmask.f32 4368
        %vm755 = vmor %vm685, %vm754
        %v757 = vshrl.u32 %v752, 16
        %v759 = vrot.slane %v757, 7
        %v760 = vshll.u32 %v752, 16
        %v762 = vor.u32 %v759, %v760
        %v763 = vrot.slane %v759, 4
        %v765 = vshrl.u32 %v753, 16
        %v767 = vrot.slane %v765, 7
        %v768 = vshll.u32 %v753, 16
        %v770 = vor.u32 %v767, %v768
        %v771 = vsel %vm755, %v763, %v770
        %v772 = vrot.slane %v767, 4
        %vm776 = vcmask 27648
        %vm777 = vmand %vm776, %vm717
        %v778 = vld [vmem:[#allocation2] sm:$0xf]
        %v779 = vsel %vm777, %v762, %v778
        %780 = vst [vmem:[#allocation2] sm:$0xf] %v779
        %vm781 = vcmask 27648
        %782 = vst.msk [vmem:[#allocation2 + $0x4] sm:$0xf] %vm781, %v771
        %v783 = vld [vmem:[#allocation2 + $0x8] sm:$0x1]
        %v784 = vsel %vm686, %v772, %v783
        %785 = vst [vmem:[#allocation2 + $0x8] sm:$0x1] %v784
        %v787 = vunpack.c.l.b16 %v683
        %v788 = vunpack.c.h.b16 %v683
        %v789 = vpack.c.b16 %v787, %v787
        %v790 = vpack.c.b16 %v788, %v788
        %v792 = vshrl.u32 %v789, 16
        %v794 = vrot.slane %v792, 7
        %v795 = vshll.u32 %v789, 16
        %v797 = vor.u32 %v794, %v795
        %v798 = vrot.slane %v794, 4
        %v800 = vshrl.u32 %v790, 16
        %v802 = vrot.slane %v800, 7
        %v803 = vshll.u32 %v790, 16
        %v805 = vor.u32 %v802, %v803
        %v806 = vsel %vm755, %v798, %v805
        %v807 = vrot.slane %v802, 4
        %s811 = scalar_lea.vmem [#allocation2], 108
        %v812 = vld [vmem:[%s811] sm:$0xf]
        %v813 = vsel %vm777, %v797, %v812
        %814 = vst [vmem:[%s811] sm:$0xf] %v813
        %815 = vst.msk [vmem:[%s811 + $0x4] sm:$0xf] %vm781, %v806
        %v816 = vld [vmem:[%s811 + $0x8] sm:$0x1]
        %v817 = vsel %vm686, %v807, %v816
        %818 = vst [vmem:[%s811 + $0x8] sm:$0x1] %v817
        %v827 = vunpack.c.l.b16 %v605
        %v828 = vunpack.c.h.b16 %v605
        %v829 = vunpack.c.l.b16 %v606
        %v830 = vunpack.c.h.b16 %v606
        %v831 = vunpack.c.l.b16 %v607
        %v832 = vunpack.c.h.b16 %v607
        %v833 = vunpack.c.l.b16 %v608
        %v834 = vunpack.c.h.b16 %v608
        %v835 = vunpack.c.l.b16 %v609
        %v836 = vunpack.c.h.b16 %v609
        %v837 = vunpack.c.l.b16 %v610
        %v838 = vunpack.c.h.b16 %v610
        %v839 = vunpack.c.l.b16 %v611
        %v840 = vunpack.c.h.b16 %v611
        %v841 = vunpack.c.l.b16 %v612
        %v842 = vunpack.c.h.b16 %v612
        %v843 = vpack.c.b16 %v827, %v827
        %v844 = vpack.c.b16 %v828, %v828
        %v845 = vpack.c.b16 %v829, %v829
        %v846 = vpack.c.b16 %v830, %v830
        %v847 = vpack.c.b16 %v831, %v831
        %v848 = vpack.c.b16 %v832, %v832
        %v849 = vpack.c.b16 %v833, %v833
        %v850 = vpack.c.b16 %v834, %v834
        %v851 = vpack.c.b16 %v835, %v835
        %v852 = vpack.c.b16 %v836, %v836
        %v853 = vpack.c.b16 %v837, %v837
        %v854 = vpack.c.b16 %v838, %v838
        %v855 = vpack.c.b16 %v839, %v839
        %v856 = vpack.c.b16 %v840, %v840
        %v857 = vpack.c.b16 %v841, %v841
        %v858 = vpack.c.b16 %v842, %v842
        %v860 = vshrl.u32 %v843, 16
        %v862 = vrot.slane %v860, 7
        %v863 = vshll.u32 %v843, 16
        %v865 = vor.u32 %v862, %v863
        %v866 = vrot.slane %v862, 4
        %v868 = vshrl.u32 %v844, 16
        %v870 = vrot.slane %v868, 7
        %v871 = vshll.u32 %v844, 16
        %v873 = vor.u32 %v870, %v871
        %v874 = vsel %vm755, %v866, %v873
        %v875 = vrot.slane %v870, 4
        %v877 = vshrl.u32 %v845, 16
        %v879 = vrot.slane %v877, 7
        %v880 = vshll.u32 %v845, 16
        %v882 = vor.u32 %v879, %v880
        %v883 = vrot.slane %v879, 4
        %v885 = vshrl.u32 %v846, 16
        %v887 = vrot.slane %v885, 7
        %v888 = vshll.u32 %v846, 16
        %v890 = vor.u32 %v887, %v888
        %v891 = vsel %vm755, %v883, %v890
        %v892 = vrot.slane %v887, 4
        %v894 = vshrl.u32 %v847, 16
        %v896 = vrot.slane %v894, 7
        %v897 = vshll.u32 %v847, 16
        %v899 = vor.u32 %v896, %v897
        %v900 = vrot.slane %v896, 4
        %v902 = vshrl.u32 %v848, 16
        %v904 = vrot.slane %v902, 7
        %v905 = vshll.u32 %v848, 16
        %v907 = vor.u32 %v904, %v905
        %v908 = vsel %vm755, %v900, %v907
        %v909 = vrot.slane %v904, 4
        %v911 = vshrl.u32 %v849, 16
        %v913 = vrot.slane %v911, 7
        %v914 = vshll.u32 %v849, 16
        %v916 = vor.u32 %v913, %v914
        %v917 = vrot.slane %v913, 4
        %v919 = vshrl.u32 %v850, 16
        %v921 = vrot.slane %v919, 7
        %v922 = vshll.u32 %v850, 16
        %v924 = vor.u32 %v921, %v922
        %v925 = vsel %vm755, %v917, %v924
        %v926 = vrot.slane %v921, 4
        %v928 = vshrl.u32 %v851, 16
        %v930 = vrot.slane %v928, 7
        %v931 = vshll.u32 %v851, 16
        %v933 = vor.u32 %v930, %v931
        %v934 = vrot.slane %v930, 4
        %v936 = vshrl.u32 %v852, 16
        %v938 = vrot.slane %v936, 7
        %v939 = vshll.u32 %v852, 16
        %v941 = vor.u32 %v938, %v939
        %v942 = vsel %vm755, %v934, %v941
        %v943 = vrot.slane %v938, 4
        %v945 = vshrl.u32 %v853, 16
        %v947 = vrot.slane %v945, 7
        %v948 = vshll.u32 %v853, 16
        %v950 = vor.u32 %v947, %v948
        %v951 = vrot.slane %v947, 4
        %v953 = vshrl.u32 %v854, 16
        %v955 = vrot.slane %v953, 7
        %v956 = vshll.u32 %v854, 16
        %v958 = vor.u32 %v955, %v956
        %v959 = vsel %vm755, %v951, %v958
        %v960 = vrot.slane %v955, 4
        %v962 = vshrl.u32 %v855, 16
        %v964 = vrot.slane %v962, 7
        %v965 = vshll.u32 %v855, 16
        %v967 = vor.u32 %v964, %v965
        %v968 = vrot.slane %v964, 4
        %v970 = vshrl.u32 %v856, 16
        %v972 = vrot.slane %v970, 7
        %v973 = vshll.u32 %v856, 16
        %v975 = vor.u32 %v972, %v973
        %v976 = vsel %vm755, %v968, %v975
        %v977 = vrot.slane %v972, 4
        %v979 = vshrl.u32 %v857, 16
        %v981 = vrot.slane %v979, 7
        %v982 = vshll.u32 %v857, 16
        %v984 = vor.u32 %v981, %v982
        %v985 = vrot.slane %v981, 4
        %v987 = vshrl.u32 %v858, 16
        %v989 = vrot.slane %v987, 7
        %v990 = vshll.u32 %v858, 16
        %v992 = vor.u32 %v989, %v990
        %v993 = vsel %vm755, %v985, %v992
        %v994 = vrot.slane %v989, 4
        %s1019 = scalar_lea.vmem [#allocation2], 12
        %v1020 = vld [vmem:[%s1019] sm:$0xf]
        %v1021 = vsel %vm777, %v865, %v1020
        %1022 = vst [vmem:[%s1019] sm:$0xf] %v1021
        %1023 = vst.msk [vmem:[%s1019 + $0x4] sm:$0xf] %vm781, %v874
        %v1024 = vld [vmem:[%s1019 + $0x8] sm:$0x1]
        %v1025 = vsel %vm686, %v875, %v1024
        %1026 = vst [vmem:[%s1019 + $0x8] sm:$0x1] %v1025
        %v1027 = vld [vmem:[%s1019 + $0xc] sm:$0xf]
        %v1028 = vsel %vm777, %v882, %v1027
        %1029 = vst [vmem:[%s1019 + $0xc] sm:$0xf] %v1028
        %1030 = vst.msk [vmem:[%s1019 + $0x10] sm:$0xf] %vm781, %v891
        %v1031 = vld [vmem:[%s1019 + $0x14] sm:$0x1]
        %v1032 = vsel %vm686, %v892, %v1031
        %1033 = vst [vmem:[%s1019 + $0x14] sm:$0x1] %v1032
        %v1034 = vld [vmem:[%s1019 + $0x18] sm:$0xf]
        %v1035 = vsel %vm777, %v899, %v1034
        %1036 = vst [vmem:[%s1019 + $0x18] sm:$0xf] %v1035
        %1037 = vst.msk [vmem:[%s1019 + $0x1c] sm:$0xf] %vm781, %v908
        %v1038 = vld [vmem:[%s1019 + $0x20] sm:$0x1]
        %v1039 = vsel %vm686, %v909, %v1038
        %1040 = vst [vmem:[%s1019 + $0x20] sm:$0x1] %v1039
        %v1041 = vld [vmem:[%s1019 + $0x24] sm:$0xf]
        %v1042 = vsel %vm777, %v916, %v1041
        %1043 = vst [vmem:[%s1019 + $0x24] sm:$0xf] %v1042
        %1044 = vst.msk [vmem:[%s1019 + $0x28] sm:$0xf] %vm781, %v925
        %v1045 = vld [vmem:[%s1019 + $0x2c] sm:$0x1]
        %v1046 = vsel %vm686, %v926, %v1045
        %1047 = vst [vmem:[%s1019 + $0x2c] sm:$0x1] %v1046
        %v1048 = vld [vmem:[%s1019 + $0x30] sm:$0xf]
        %v1049 = vsel %vm777, %v933, %v1048
        %1050 = vst [vmem:[%s1019 + $0x30] sm:$0xf] %v1049
        %1051 = vst.msk [vmem:[%s1019 + $0x34] sm:$0xf] %vm781, %v942
        %v1052 = vld [vmem:[%s1019 + $0x38] sm:$0x1]
        %v1053 = vsel %vm686, %v943, %v1052
        %1054 = vst [vmem:[%s1019 + $0x38] sm:$0x1] %v1053
        %v1055 = vld [vmem:[%s1019 + $0x3c] sm:$0xf]
        %v1056 = vsel %vm777, %v950, %v1055
        %1057 = vst [vmem:[%s1019 + $0x3c] sm:$0xf] %v1056
        %1058 = vst.msk [vmem:[%s1019 + $0x40] sm:$0xf] %vm781, %v959
        %v1059 = vld [vmem:[%s1019 + $0x44] sm:$0x1]
        %v1060 = vsel %vm686, %v960, %v1059
        %1061 = vst [vmem:[%s1019 + $0x44] sm:$0x1] %v1060
        %v1062 = vld [vmem:[%s1019 + $0x48] sm:$0xf]
        %v1063 = vsel %vm777, %v967, %v1062
        %1064 = vst [vmem:[%s1019 + $0x48] sm:$0xf] %v1063
        %1065 = vst.msk [vmem:[%s1019 + $0x4c] sm:$0xf] %vm781, %v976
        %v1066 = vld [vmem:[%s1019 + $0x50] sm:$0x1]
        %v1067 = vsel %vm686, %v977, %v1066
        %1068 = vst [vmem:[%s1019 + $0x50] sm:$0x1] %v1067
        %v1069 = vld [vmem:[%s1019 + $0x54] sm:$0xf]
        %v1070 = vsel %vm777, %v984, %v1069
        %1071 = vst [vmem:[%s1019 + $0x54] sm:$0xf] %v1070
        %1072 = vst.msk [vmem:[%s1019 + $0x58] sm:$0xf] %vm781, %v993
        %v1073 = vld [vmem:[%s1019 + $0x5c] sm:$0x1]
        %v1074 = vsel %vm686, %v994, %v1073
        %1075 = vst [vmem:[%s1019 + $0x5c] sm:$0x1] %v1074
        %p1076 = scmp.eq.s32.totalorder %s33, 0
        // Predicated region
        $region61: #{tpu_custom_call.1} parent=51 // pred_check
          %p1077 = pneg %p1076
        $region62: #{tpu_custom_call.1} parent=51 // pred_check_branch
          %1079 = sbr.rel (%p1077) target = $region64
        $region63: #{tpu_custom_call.1} parent=51 // pred_region
          %v1080 = vld [vmem:[#allocation2] sm:$0xf]
          %v1081 = vsel %vm777, 0, %v1080
          %1082 = vst [vmem:[#allocation2] sm:$0xf] %v1081
          %1083 = vst.msk [vmem:[#allocation2 + $0x4] sm:$0xf] %vm781, 0
          %v1084 = vld [vmem:[#allocation2 + $0x8] sm:$0x1]
          %v1085 = vsel %vm686, 0, %v1084
          %1086 = vst [vmem:[#allocation2 + $0x8] sm:$0x1] %v1085
        $region64: #{tpu_custom_call.1} parent=51 // pred_fallthru
          _
        %p1087 = scmp.eq.s32.totalorder %s33, 1
        // Predicated region
        $region65: #{tpu_custom_call.1} parent=51 // pred_check
          %p1088 = pneg %p1087
        $region66: #{tpu_custom_call.1} parent=51 // pred_check_branch
          %1090 = sbr.rel (%p1088) target = $region68
        $region67: #{tpu_custom_call.1} parent=51 // pred_region
          %v1091 = vld [vmem:[%s811] sm:$0xf]
          %v1092 = vsel %vm777, 0, %v1091
          %1093 = vst [vmem:[%s811] sm:$0xf] %v1092
          %1094 = vst.msk [vmem:[%s811 + $0x4] sm:$0xf] %vm781, 0
          %v1095 = vld [vmem:[%s811 + $0x8] sm:$0x1]
          %v1096 = vsel %vm686, 0, %v1095
          %1097 = vst [vmem:[%s811 + $0x8] sm:$0x1] %v1096
        $region68: #{tpu_custom_call.1} parent=51 // pred_fallthru
          _
        %v1098 = vld [vmem:[#allocation2] sm:$0xf]
        %v1099 = vld [vmem:[#allocation2 + $0x4] sm:$0xf]
        %v1100 = vld [vmem:[#allocation2 + $0xc] sm:$0xf]
        %v1101 = vld [vmem:[#allocation2 + $0x10] sm:$0xf]
        %v1102 = vld [vmem:[#allocation2 + $0x18] sm:$0xf]
        %v1103 = vld [vmem:[#allocation2 + $0x1c] sm:$0xf]
        %v1104 = vld [vmem:[#allocation2 + $0x24] sm:$0xf]
        %v1105 = vld [vmem:[#allocation2 + $0x28] sm:$0xf]
        %v1106 = vld [vmem:[#allocation2 + $0x30] sm:$0xf]
        %v1107 = vld [vmem:[#allocation2 + $0x34] sm:$0xf]
        %v1108 = vld [vmem:[#allocation2 + $0x3c] sm:$0xf]
        %v1109 = vld [vmem:[#allocation2 + $0x40] sm:$0xf]
        %v1110 = vld [vmem:[#allocation2 + $0x48] sm:$0xf]
        %v1111 = vld [vmem:[#allocation2 + $0x4c] sm:$0xf]
        %v1112 = vld [vmem:[#allocation2 + $0x54] sm:$0xf]
        %v1113 = vld [vmem:[#allocation2 + $0x58] sm:$0xf]
        %1114 = vst.msk [vmem:[#allocation3] sm:$0xf] %vm781, %v1098
        %1115 = vst.msk [vmem:[#allocation3 + $0x4] sm:$0xf] %vm781, %v1099
        %1116 = vst.msk [vmem:[#allocation3 + $0x8] sm:$0xf] %vm781, %v1100
        %1117 = vst.msk [vmem:[#allocation3 + $0xc] sm:$0xf] %vm781, %v1101
        %1118 = vst.msk [vmem:[#allocation3 + $0x10] sm:$0xf] %vm781, %v1102
        %1119 = vst.msk [vmem:[#allocation3 + $0x14] sm:$0xf] %vm781, %v1103
        %1120 = vst.msk [vmem:[#allocation3 + $0x18] sm:$0xf] %vm781, %v1104
        %1121 = vst.msk [vmem:[#allocation3 + $0x1c] sm:$0xf] %vm781, %v1105
        %1122 = vst.msk [vmem:[#allocation3 + $0x20] sm:$0xf] %vm781, %v1106
        %1123 = vst.msk [vmem:[#allocation3 + $0x24] sm:$0xf] %vm781, %v1107
        %1124 = vst.msk [vmem:[#allocation3 + $0x28] sm:$0xf] %vm781, %v1108
        %1125 = vst.msk [vmem:[#allocation3 + $0x2c] sm:$0xf] %vm781, %v1109
        %1126 = vst.msk [vmem:[#allocation3 + $0x30] sm:$0xf] %vm781, %v1110
        %1127 = vst.msk [vmem:[#allocation3 + $0x34] sm:$0xf] %vm781, %v1111
        %1128 = vst.msk [vmem:[#allocation3 + $0x38] sm:$0xf] %vm781, %v1112
        %1129 = vst.msk [vmem:[#allocation3 + $0x3c] sm:$0xf] %vm781, %v1113
        %v1130 = vld [vmem:[#allocation2] sm:$0xf]
        %v1131 = vld [vmem:[#allocation2 + $0x4] sm:$0xf]
        %v1132 = vld [vmem:[#allocation2 + $0x8] sm:$0x1]
        %v1133 = vld [vmem:[#allocation2 + $0xc] sm:$0xf]
        %v1134 = vld [vmem:[#allocation2 + $0x10] sm:$0xf]
        %v1135 = vld [vmem:[#allocation2 + $0x14] sm:$0x1]
        %v1136 = vld [vmem:[#allocation2 + $0x18] sm:$0xf]
        %v1137 = vld [vmem:[#allocation2 + $0x1c] sm:$0xf]
        %v1138 = vld [vmem:[#allocation2 + $0x20] sm:$0x1]
        %v1139 = vld [vmem:[#allocation2 + $0x24] sm:$0xf]
        %v1140 = vld [vmem:[#allocation2 + $0x28] sm:$0xf]
        %v1141 = vld [vmem:[#allocation2 + $0x2c] sm:$0x1]
        %v1142 = vld [vmem:[#allocation2 + $0x30] sm:$0xf]
        %v1143 = vld [vmem:[#allocation2 + $0x34] sm:$0xf]
        %v1144 = vld [vmem:[#allocation2 + $0x38] sm:$0x1]
        %v1145 = vld [vmem:[#allocation2 + $0x3c] sm:$0xf]
        %v1146 = vld [vmem:[#allocation2 + $0x40] sm:$0xf]
        %v1147 = vld [vmem:[#allocation2 + $0x44] sm:$0x1]
        %v1148 = vld [vmem:[#allocation2 + $0x48] sm:$0xf]
        %v1149 = vld [vmem:[#allocation2 + $0x4c] sm:$0xf]
        %v1150 = vld [vmem:[#allocation2 + $0x50] sm:$0x1]
        %v1151 = vld [vmem:[#allocation2 + $0x54] sm:$0xf]
        %v1152 = vld [vmem:[#allocation2 + $0x58] sm:$0xf]
        %v1153 = vld [vmem:[#allocation2 + $0x5c] sm:$0x1]
        %vm1154 = vsmask.f32 3328
        %vm1155 = vsmask.f32 7440
        %vm1156 = vmor %vm1154, %vm1155
        %v1158 = vshrl.u32 %v1130, 16
        %v1160 = vrot.slane %v1158, 4
        %v1161 = vshll.u32 %v1130, 16
        %v1163 = vrot.slane %v1161, 5
        %v1164 = vor.u32 %v1160, %v1163
        %v1165 = vrot.slane %v1164, 4
        %v1167 = vshll.u32 %v1131, 16
        %v1169 = vrot.slane %v1167, 5
        %v1170 = vsel %vm1156, %v1165, %v1169
        %v1171 = vshrl.u32 %v1131, 16
        %v1173 = vrot.slane %v1171, 4
        %v1174 = vor.u32 %v1173, %v1169
        %v1175 = vrot.slane %v1174, 4
        %v1177 = vshll.u32 %v1132, 16
        %v1179 = vrot.slane %v1177, 5
        %v1180 = vsel %vm1156, %v1175, %v1179
        %v1182 = vshrl.u32 %v1133, 16
        %v1184 = vrot.slane %v1182, 4
        %v1185 = vshll.u32 %v1133, 16
        %v1187 = vrot.slane %v1185, 5
        %v1188 = vor.u32 %v1184, %v1187
        %v1189 = vrot.slane %v1188, 4
        %v1191 = vshll.u32 %v1134, 16
        %v1193 = vrot.slane %v1191, 5
        %v1194 = vsel %vm1156, %v1189, %v1193
        %v1195 = vshrl.u32 %v1134, 16
        %v1197 = vrot.slane %v1195, 4
        %v1198 = vor.u32 %v1197, %v1193
        %v1199 = vrot.slane %v1198, 4
        %v1201 = vshll.u32 %v1135, 16
        %v1203 = vrot.slane %v1201, 5
        %v1204 = vsel %vm1156, %v1199, %v1203
        %v1206 = vshrl.u32 %v1136, 16
        %v1208 = vrot.slane %v1206, 4
        %v1209 = vshll.u32 %v1136, 16
        %v1211 = vrot.slane %v1209, 5
        %v1212 = vor.u32 %v1208, %v1211
        %v1213 = vrot.slane %v1212, 4
        %v1215 = vshll.u32 %v1137, 16
        %v1217 = vrot.slane %v1215, 5
        %v1218 = vsel %vm1156, %v1213, %v1217
        %v1219 = vshrl.u32 %v1137, 16
        %v1221 = vrot.slane %v1219, 4
        %v1222 = vor.u32 %v1221, %v1217
        %v1223 = vrot.slane %v1222, 4
        %v1225 = vshll.u32 %v1138, 16
        %v1227 = vrot.slane %v1225, 5
        %v1228 = vsel %vm1156, %v1223, %v1227
        %v1230 = vshrl.u32 %v1139, 16
        %v1232 = vrot.slane %v1230, 4
        %v1233 = vshll.u32 %v1139, 16
        %v1235 = vrot.slane %v1233, 5
        %v1236 = vor.u32 %v1232, %v1235
        %v1237 = vrot.slane %v1236, 4
        %v1239 = vshll.u32 %v1140, 16
        %v1241 = vrot.slane %v1239, 5
        %v1242 = vsel %vm1156, %v1237, %v1241
        %v1243 = vshrl.u32 %v1140, 16
        %v1245 = vrot.slane %v1243, 4
        %v1246 = vor.u32 %v1245, %v1241
        %v1247 = vrot.slane %v1246, 4
        %v1249 = vshll.u32 %v1141, 16
        %v1251 = vrot.slane %v1249, 5
        %v1252 = vsel %vm1156, %v1247, %v1251
        %v1254 = vshrl.u32 %v1142, 16
        %v1256 = vrot.slane %v1254, 4
        %v1257 = vshll.u32 %v1142, 16
        %v1259 = vrot.slane %v1257, 5
        %v1260 = vor.u32 %v1256, %v1259
        %v1261 = vrot.slane %v1260, 4
        %v1263 = vshll.u32 %v1143, 16
        %v1265 = vrot.slane %v1263, 5
        %v1266 = vsel %vm1156, %v1261, %v1265
        %v1267 = vshrl.u32 %v1143, 16
        %v1269 = vrot.slane %v1267, 4
        %v1270 = vor.u32 %v1269, %v1265
        %v1271 = vrot.slane %v1270, 4
        %v1273 = vshll.u32 %v1144, 16
        %v1275 = vrot.slane %v1273, 5
        %v1276 = vsel %vm1156, %v1271, %v1275
        %v1278 = vshrl.u32 %v1145, 16
        %v1280 = vrot.slane %v1278, 4
        %v1281 = vshll.u32 %v1145, 16
        %v1283 = vrot.slane %v1281, 5
        %v1284 = vor.u32 %v1280, %v1283
        %v1285 = vrot.slane %v1284, 4
        %v1287 = vshll.u32 %v1146, 16
        %v1289 = vrot.slane %v1287, 5
        %v1290 = vsel %vm1156, %v1285, %v1289
        %v1291 = vshrl.u32 %v1146, 16
        %v1293 = vrot.slane %v1291, 4
        %v1294 = vor.u32 %v1293, %v1289
        %v1295 = vrot.slane %v1294, 4
        %v1297 = vshll.u32 %v1147, 16
        %v1299 = vrot.slane %v1297, 5
        %v1300 = vsel %vm1156, %v1295, %v1299
        %v1302 = vshrl.u32 %v1148, 16
        %v1304 = vrot.slane %v1302, 4
        %v1305 = vshll.u32 %v1148, 16
        %v1307 = vrot.slane %v1305, 5
        %v1308 = vor.u32 %v1304, %v1307
        %v1309 = vrot.slane %v1308, 4
        %v1311 = vshll.u32 %v1149, 16
        %v1313 = vrot.slane %v1311, 5
        %v1314 = vsel %vm1156, %v1309, %v1313
        %v1315 = vshrl.u32 %v1149, 16
        %v1317 = vrot.slane %v1315, 4
        %v1318 = vor.u32 %v1317, %v1313
        %v1319 = vrot.slane %v1318, 4
        %v1321 = vshll.u32 %v1150, 16
        %v1323 = vrot.slane %v1321, 5
        %v1324 = vsel %vm1156, %v1319, %v1323
        %v1326 = vshrl.u32 %v1151, 16
        %v1328 = vrot.slane %v1326, 4
        %v1329 = vshll.u32 %v1151, 16
        %v1331 = vrot.slane %v1329, 5
        %v1332 = vor.u32 %v1328, %v1331
        %v1333 = vrot.slane %v1332, 4
        %v1335 = vshll.u32 %v1152, 16
        %v1337 = vrot.slane %v1335, 5
        %v1338 = vsel %vm1156, %v1333, %v1337
        %v1339 = vshrl.u32 %v1152, 16
        %v1341 = vrot.slane %v1339, 4
        %v1342 = vor.u32 %v1341, %v1337
        %v1343 = vrot.slane %v1342, 4
        %v1345 = vshll.u32 %v1153, 16
        %v1347 = vrot.slane %v1345, 5
        %v1348 = vsel %vm1156, %v1343, %v1347
        %1349 = vrot.lane.b32.xlu0 %v1170, 4
        %v1350 = vpop.permute.xlu0 %1349
        %1351 = vrot.lane.b32.xlu0 %v1180, 4
        %v1352 = vpop.permute.xlu0 %1351
        %1353 = vrot.lane.b32.xlu0 %v1194, 4
        %v1354 = vpop.permute.xlu0 %1353
        %1355 = vrot.lane.b32.xlu0 %v1204, 4
        %v1356 = vpop.permute.xlu0 %1355
        %1357 = vrot.lane.b32.xlu0 %v1218, 4
        %v1358 = vpop.permute.xlu0 %1357
        %1359 = vrot.lane.b32.xlu0 %v1228, 4
        %v1360 = vpop.permute.xlu0 %1359
        %1361 = vrot.lane.b32.xlu0 %v1242, 4
        %v1362 = vpop.permute.xlu0 %1361
        %1363 = vrot.lane.b32.xlu0 %v1252, 4
        %v1364 = vpop.permute.xlu0 %1363
        %1365 = vrot.lane.b32.xlu0 %v1266, 4
        %v1366 = vpop.permute.xlu0 %1365
        %1367 = vrot.lane.b32.xlu0 %v1276, 4
        %v1368 = vpop.permute.xlu0 %1367
        %1369 = vrot.lane.b32.xlu0 %v1290, 4
        %v1370 = vpop.permute.xlu0 %1369
        %1371 = vrot.lane.b32.xlu0 %v1300, 4
        %v1372 = vpop.permute.xlu0 %1371
        %1373 = vrot.lane.b32.xlu0 %v1314, 4
        %v1374 = vpop.permute.xlu0 %1373
        %1375 = vrot.lane.b32.xlu0 %v1324, 4
        %v1376 = vpop.permute.xlu0 %1375
        %1377 = vrot.lane.b32.xlu0 %v1338, 4
        %v1378 = vpop.permute.xlu0 %1377
        %1379 = vrot.lane.b32.xlu0 %v1348, 4
        %v1380 = vpop.permute.xlu0 %1379
        %vm1397 = vcmask 60448
        %1398 = vst.msk [vmem:[#allocation3] sm:$0xf] %vm1397, %v1350
        %1399 = vst.msk [vmem:[#allocation3 + $0x4] sm:$0xf] %vm1397, %v1352
        %1400 = vst.msk [vmem:[#allocation3 + $0x8] sm:$0xf] %vm1397, %v1354
        %1401 = vst.msk [vmem:[#allocation3 + $0xc] sm:$0xf] %vm1397, %v1356
        %1402 = vst.msk [vmem:[#allocation3 + $0x10] sm:$0xf] %vm1397, %v1358
        %1403 = vst.msk [vmem:[#allocation3 + $0x14] sm:$0xf] %vm1397, %v1360
        %1404 = vst.msk [vmem:[#allocation3 + $0x18] sm:$0xf] %vm1397, %v1362
        %1405 = vst.msk [vmem:[#allocation3 + $0x1c] sm:$0xf] %vm1397, %v1364
        %1406 = vst.msk [vmem:[#allocation3 + $0x20] sm:$0xf] %vm1397, %v1366
        %1407 = vst.msk [vmem:[#allocation3 + $0x24] sm:$0xf] %vm1397, %v1368
        %1408 = vst.msk [vmem:[#allocation3 + $0x28] sm:$0xf] %vm1397, %v1370
        %1409 = vst.msk [vmem:[#allocation3 + $0x2c] sm:$0xf] %vm1397, %v1372
        %1410 = vst.msk [vmem:[#allocation3 + $0x30] sm:$0xf] %vm1397, %v1374
        %1411 = vst.msk [vmem:[#allocation3 + $0x34] sm:$0xf] %vm1397, %v1376
        %1412 = vst.msk [vmem:[#allocation3 + $0x38] sm:$0xf] %vm1397, %v1378
        %1413 = vst.msk [vmem:[#allocation3 + $0x3c] sm:$0xf] %vm1397, %v1380
        %v1414 = vld [vmem:[#allocation2] sm:$0xe]
        %v1415 = vld [vmem:[#allocation2 + $0x4] sm:$0xf]
        %v1416 = vld [vmem:[#allocation2 + $0x8] sm:$0x1]
        %v1417 = vld [vmem:[#allocation2 + $0xc] sm:$0xe]
        %v1418 = vld [vmem:[#allocation2 + $0x10] sm:$0xf]
        %v1419 = vld [vmem:[#allocation2 + $0x14] sm:$0x1]
        %v1420 = vld [vmem:[#allocation2 + $0x18] sm:$0xe]
        %v1421 = vld [vmem:[#allocation2 + $0x1c] sm:$0xf]
        %v1422 = vld [vmem:[#allocation2 + $0x20] sm:$0x1]
        %v1423 = vld [vmem:[#allocation2 + $0x24] sm:$0xe]
        %v1424 = vld [vmem:[#allocation2 + $0x28] sm:$0xf]
        %v1425 = vld [vmem:[#allocation2 + $0x2c] sm:$0x1]
        %v1426 = vld [vmem:[#allocation2 + $0x30] sm:$0xe]
        %v1427 = vld [vmem:[#allocation2 + $0x34] sm:$0xf]
        %v1428 = vld [vmem:[#allocation2 + $0x38] sm:$0x1]
        %v1429 = vld [vmem:[#allocation2 + $0x3c] sm:$0xe]
        %v1430 = vld [vmem:[#allocation2 + $0x40] sm:$0xf]
        %v1431 = vld [vmem:[#allocation2 + $0x44] sm:$0x1]
        %v1432 = vld [vmem:[#allocation2 + $0x48] sm:$0xe]
        %v1433 = vld [vmem:[#allocation2 + $0x4c] sm:$0xf]
        %v1434 = vld [vmem:[#allocation2 + $0x50] sm:$0x1]
        %v1435 = vld [vmem:[#allocation2 + $0x54] sm:$0xe]
        %v1436 = vld [vmem:[#allocation2 + $0x58] sm:$0xf]
        %v1437 = vld [vmem:[#allocation2 + $0x5c] sm:$0x1]
        %vm1462 = vcmask 1042432
        %vm1463 = vcmask 1046532
        %vm1464 = vmor %vm1462, %vm1463
        %v1465 = vrot.slane %v1414, 5
        %v1466 = vrot.slane %v1465, 4
        %v1467 = vrot.slane %v1415, 5
        %v1468 = vsel %vm1464, %v1466, %v1467
        %v1469 = vrot.slane %v1467, 4
        %v1470 = vrot.slane %v1416, 5
        %v1471 = vsel %vm1464, %v1469, %v1470
        %v1472 = vrot.slane %v1417, 5
        %v1473 = vrot.slane %v1472, 4
        %v1474 = vrot.slane %v1418, 5
        %v1475 = vsel %vm1464, %v1473, %v1474
        %v1476 = vrot.slane %v1474, 4
        %v1477 = vrot.slane %v1419, 5
        %v1478 = vsel %vm1464, %v1476, %v1477
        %v1479 = vrot.slane %v1420, 5
        %v1480 = vrot.slane %v1479, 4
        %v1481 = vrot.slane %v1421, 5
        %v1482 = vsel %vm1464, %v1480, %v1481
        %v1483 = vrot.slane %v1481, 4
        %v1484 = vrot.slane %v1422, 5
        %v1485 = vsel %vm1464, %v1483, %v1484
        %v1486 = vrot.slane %v1423, 5
        %v1487 = vrot.slane %v1486, 4
        %v1488 = vrot.slane %v1424, 5
        %v1489 = vsel %vm1464, %v1487, %v1488
        %v1490 = vrot.slane %v1488, 4
        %v1491 = vrot.slane %v1425, 5
        %v1492 = vsel %vm1464, %v1490, %v1491
        %v1493 = vrot.slane %v1426, 5
        %v1494 = vrot.slane %v1493, 4
        %v1495 = vrot.slane %v1427, 5
        %v1496 = vsel %vm1464, %v1494, %v1495
        %v1497 = vrot.slane %v1495, 4
        %v1498 = vrot.slane %v1428, 5
        %v1499 = vsel %vm1464, %v1497, %v1498
        %v1500 = vrot.slane %v1429, 5
        %v1501 = vrot.slane %v1500, 4
        %v1502 = vrot.slane %v1430, 5
        %v1503 = vsel %vm1464, %v1501, %v1502
        %v1504 = vrot.slane %v1502, 4
        %v1505 = vrot.slane %v1431, 5
        %v1506 = vsel %vm1464, %v1504, %v1505
        %v1507 = vrot.slane %v1432, 5
        %v1508 = vrot.slane %v1507, 4
        %v1509 = vrot.slane %v1433, 5
        %v1510 = vsel %vm1464, %v1508, %v1509
        %v1511 = vrot.slane %v1509, 4
        %v1512 = vrot.slane %v1434, 5
        %v1513 = vsel %vm1464, %v1511, %v1512
        %v1514 = vrot.slane %v1435, 5
        %v1515 = vrot.slane %v1514, 4
        %v1516 = vrot.slane %v1436, 5
        %v1517 = vsel %vm1464, %v1515, %v1516
        %v1518 = vrot.slane %v1516, 4
        %v1519 = vrot.slane %v1437, 5
        %v1520 = vsel %vm1464, %v1518, %v1519
        %1521 = vrot.lane.b32.xlu0 %v1468, 8
        %v1522 = vpop.permute.xlu0 %1521
        %1523 = vrot.lane.b32.xlu0 %v1471, 8
        %v1524 = vpop.permute.xlu0 %1523
        %1525 = vrot.lane.b32.xlu0 %v1475, 8
        %v1526 = vpop.permute.xlu0 %1525
        %1527 = vrot.lane.b32.xlu0 %v1478, 8
        %v1528 = vpop.permute.xlu0 %1527
        %1529 = vrot.lane.b32.xlu0 %v1482, 8
        %v1530 = vpop.permute.xlu0 %1529
        %1531 = vrot.lane.b32.xlu0 %v1485, 8
        %v1532 = vpop.permute.xlu0 %1531
        %1533 = vrot.lane.b32.xlu0 %v1489, 8
        %v1534 = vpop.permute.xlu0 %1533
        %1535 = vrot.lane.b32.xlu0 %v1492, 8
        %v1536 = vpop.permute.xlu0 %1535
        %1537 = vrot.lane.b32.xlu0 %v1496, 8
        %v1538 = vpop.permute.xlu0 %1537
        %1539 = vrot.lane.b32.xlu0 %v1499, 8
        %v1540 = vpop.permute.xlu0 %1539
        %1541 = vrot.lane.b32.xlu0 %v1503, 8
        %v1542 = vpop.permute.xlu0 %1541
        %1543 = vrot.lane.b32.xlu0 %v1506, 8
        %v1544 = vpop.permute.xlu0 %1543
        %1545 = vrot.lane.b32.xlu0 %v1510, 8
        %v1546 = vpop.permute.xlu0 %1545
        %1547 = vrot.lane.b32.xlu0 %v1513, 8
        %v1548 = vpop.permute.xlu0 %1547
        %1549 = vrot.lane.b32.xlu0 %v1517, 8
        %v1550 = vpop.permute.xlu0 %1549
        %1551 = vrot.lane.b32.xlu0 %v1520, 8
        %v1552 = vpop.permute.xlu0 %1551
        %vm1569 = vcmask 93248
        %1570 = vst.msk [vmem:[#allocation3] sm:$0xf] %vm1569, %v1522
        %1571 = vst.msk [vmem:[#allocation3 + $0x4] sm:$0xf] %vm1569, %v1524
        %1572 = vst.msk [vmem:[#allocation3 + $0x8] sm:$0xf] %vm1569, %v1526
        %1573 = vst.msk [vmem:[#allocation3 + $0xc] sm:$0xf] %vm1569, %v1528
        %1574 = vst.msk [vmem:[#allocation3 + $0x10] sm:$0xf] %vm1569, %v1530
        %1575 = vst.msk [vmem:[#allocation3 + $0x14] sm:$0xf] %vm1569, %v1532
        %1576 = vst.msk [vmem:[#allocation3 + $0x18] sm:$0xf] %vm1569, %v1534
        %1577 = vst.msk [vmem:[#allocation3 + $0x1c] sm:$0xf] %vm1569, %v1536
        %1578 = vst.msk [vmem:[#allocation3 + $0x20] sm:$0xf] %vm1569, %v1538
        %1579 = vst.msk [vmem:[#allocation3 + $0x24] sm:$0xf] %vm1569, %v1540
        %1580 = vst.msk [vmem:[#allocation3 + $0x28] sm:$0xf] %vm1569, %v1542
        %1581 = vst.msk [vmem:[#allocation3 + $0x2c] sm:$0xf] %vm1569, %v1544
        %1582 = vst.msk [vmem:[#allocation3 + $0x30] sm:$0xf] %vm1569, %v1546
        %1583 = vst.msk [vmem:[#allocation3 + $0x34] sm:$0xf] %vm1569, %v1548
        %1584 = vst.msk [vmem:[#allocation3 + $0x38] sm:$0xf] %vm1569, %v1550
        %1585 = vst.msk [vmem:[#allocation3 + $0x3c] sm:$0xf] %vm1569, %v1552
        %v1586 = vld [vmem:[%s1019] sm:$0xf]
        %v1587 = vld [vmem:[%s1019 + $0x4] sm:$0xf]
        %v1588 = vld [vmem:[%s1019 + $0xc] sm:$0xf]
        %v1589 = vld [vmem:[%s1019 + $0x10] sm:$0xf]
        %v1590 = vld [vmem:[%s1019 + $0x18] sm:$0xf]
        %v1591 = vld [vmem:[%s1019 + $0x1c] sm:$0xf]
        %v1592 = vld [vmem:[%s1019 + $0x24] sm:$0xf]
        %v1593 = vld [vmem:[%s1019 + $0x28] sm:$0xf]
        %v1594 = vld [vmem:[%s1019 + $0x30] sm:$0xf]
        %v1595 = vld [vmem:[%s1019 + $0x34] sm:$0xf]
        %v1596 = vld [vmem:[%s1019 + $0x3c] sm:$0xf]
        %v1597 = vld [vmem:[%s1019 + $0x40] sm:$0xf]
        %v1598 = vld [vmem:[%s1019 + $0x48] sm:$0xf]
        %v1599 = vld [vmem:[%s1019 + $0x4c] sm:$0xf]
        %v1600 = vld [vmem:[%s1019 + $0x54] sm:$0xf]
        %v1601 = vld [vmem:[%s1019 + $0x58] sm:$0xf]
        %1618 = vrot.lane.b32.xlu0 %v1586, 12
        %v1619 = vpop.permute.xlu0 %1618
        %1620 = vrot.lane.b32.xlu0 %v1587, 12
        %v1621 = vpop.permute.xlu0 %1620
        %1622 = vrot.lane.b32.xlu0 %v1588, 12
        %v1623 = vpop.permute.xlu0 %1622
        %1624 = vrot.lane.b32.xlu0 %v1589, 12
        %v1625 = vpop.permute.xlu0 %1624
        %1626 = vrot.lane.b32.xlu0 %v1590, 12
        %v1627 = vpop.permute.xlu0 %1626
        %1628 = vrot.lane.b32.xlu0 %v1591, 12
        %v1629 = vpop.permute.xlu0 %1628
        %1630 = vrot.lane.b32.xlu0 %v1592, 12
        %v1631 = vpop.permute.xlu0 %1630
        %1632 = vrot.lane.b32.xlu0 %v1593, 12
        %v1633 = vpop.permute.xlu0 %1632
        %1634 = vrot.lane.b32.xlu0 %v1594, 12
        %v1635 = vpop.permute.xlu0 %1634
        %1636 = vrot.lane.b32.xlu0 %v1595, 12
        %v1637 = vpop.permute.xlu0 %1636
        %1638 = vrot.lane.b32.xlu0 %v1596, 12
        %v1639 = vpop.permute.xlu0 %1638
        %1640 = vrot.lane.b32.xlu0 %v1597, 12
        %v1641 = vpop.permute.xlu0 %1640
        %1642 = vrot.lane.b32.xlu0 %v1598, 12
        %v1643 = vpop.permute.xlu0 %1642
        %1644 = vrot.lane.b32.xlu0 %v1599, 12
        %v1645 = vpop.permute.xlu0 %1644
        %1646 = vrot.lane.b32.xlu0 %v1600, 12
        %v1647 = vpop.permute.xlu0 %1646
        %1648 = vrot.lane.b32.xlu0 %v1601, 12
        %v1649 = vpop.permute.xlu0 %1648
        %vm1666 = vcmask 126048
        %1667 = vst.msk [vmem:[#allocation3] sm:$0xf] %vm1666, %v1619
        %1668 = vst.msk [vmem:[#allocation3 + $0x4] sm:$0xf] %vm1666, %v1621
        %1669 = vst.msk [vmem:[#allocation3 + $0x8] sm:$0xf] %vm1666, %v1623
        %1670 = vst.msk [vmem:[#allocation3 + $0xc] sm:$0xf] %vm1666, %v1625
        %1671 = vst.msk [vmem:[#allocation3 + $0x10] sm:$0xf] %vm1666, %v1627
        %1672 = vst.msk [vmem:[#allocation3 + $0x14] sm:$0xf] %vm1666, %v1629
        %1673 = vst.msk [vmem:[#allocation3 + $0x18] sm:$0xf] %vm1666, %v1631
        %1674 = vst.msk [vmem:[#allocation3 + $0x1c] sm:$0xf] %vm1666, %v1633
        %1675 = vst.msk [vmem:[#allocation3 + $0x20] sm:$0xf] %vm1666, %v1635
        %1676 = vst.msk [vmem:[#allocation3 + $0x24] sm:$0xf] %vm1666, %v1637
        %1677 = vst.msk [vmem:[#allocation3 + $0x28] sm:$0xf] %vm1666, %v1639
        %1678 = vst.msk [vmem:[#allocation3 + $0x2c] sm:$0xf] %vm1666, %v1641
        %1679 = vst.msk [vmem:[#allocation3 + $0x30] sm:$0xf] %vm1666, %v1643
        %1680 = vst.msk [vmem:[#allocation3 + $0x34] sm:$0xf] %vm1666, %v1645
        %1681 = vst.msk [vmem:[#allocation3 + $0x38] sm:$0xf] %vm1666, %v1647
        %1682 = vst.msk [vmem:[#allocation3 + $0x3c] sm:$0xf] %vm1666, %v1649
        %1683 = vrot.lane.b32.xlu0 %v843, 16
        %v1684 = vpop.permute.xlu0 %1683
        %1685 = vrot.lane.b32.xlu0 %v844, 16
        %v1686 = vpop.permute.xlu0 %1685
        %1687 = vrot.lane.b32.xlu0 %v845, 16
        %v1688 = vpop.permute.xlu0 %1687
        %1689 = vrot.lane.b32.xlu0 %v846, 16
        %v1690 = vpop.permute.xlu0 %1689
        %1691 = vrot.lane.b32.xlu0 %v847, 16
        %v1692 = vpop.permute.xlu0 %1691
        %1693 = vrot.lane.b32.xlu0 %v848, 16
        %v1694 = vpop.permute.xlu0 %1693
        %1695 = vrot.lane.b32.xlu0 %v849, 16
        %v1696 = vpop.permute.xlu0 %1695
        %1697 = vrot.lane.b32.xlu0 %v850, 16
        %v1698 = vpop.permute.xlu0 %1697
        %1699 = vrot.lane.b32.xlu0 %v851, 16
        %v1700 = vpop.permute.xlu0 %1699
        %1701 = vrot.lane.b32.xlu0 %v852, 16
        %v1702 = vpop.permute.xlu0 %1701
        %1703 = vrot.lane.b32.xlu0 %v853, 16
        %v1704 = vpop.permute.xlu0 %1703
        %1705 = vrot.lane.b32.xlu0 %v854, 16
        %v1706 = vpop.permute.xlu0 %1705
        %1707 = vrot.lane.b32.xlu0 %v855, 16
        %v1708 = vpop.permute.xlu0 %1707
        %1709 = vrot.lane.b32.xlu0 %v856, 16
        %v1710 = vpop.permute.xlu0 %1709
        %1711 = vrot.lane.b32.xlu0 %v857, 16
        %v1712 = vpop.permute.xlu0 %1711
        %1713 = vrot.lane.b32.xlu0 %v858, 16
        %v1714 = vpop.permute.xlu0 %1713
        %vm1731 = vcmask 158848
        %1732 = vst.msk [vmem:[#allocation3] sm:$0xf] %vm1731, %v1684
        %1733 = vst.msk [vmem:[#allocation3 + $0x4] sm:$0xf] %vm1731, %v1686
        %1734 = vst.msk [vmem:[#allocation3 + $0x8] sm:$0xf] %vm1731, %v1688
        %1735 = vst.msk [vmem:[#allocation3 + $0xc] sm:$0xf] %vm1731, %v1690
        %1736 = vst.msk [vmem:[#allocation3 + $0x10] sm:$0xf] %vm1731, %v1692
        %1737 = vst.msk [vmem:[#allocation3 + $0x14] sm:$0xf] %vm1731, %v1694
        %1738 = vst.msk [vmem:[#allocation3 + $0x18] sm:$0xf] %vm1731, %v1696
        %1739 = vst.msk [vmem:[#allocation3 + $0x1c] sm:$0xf] %vm1731, %v1698
        %1740 = vst.msk [vmem:[#allocation3 + $0x20] sm:$0xf] %vm1731, %v1700
        %1741 = vst.msk [vmem:[#allocation3 + $0x24] sm:$0xf] %vm1731, %v1702
        %1742 = vst.msk [vmem:[#allocation3 + $0x28] sm:$0xf] %vm1731, %v1704
        %1743 = vst.msk [vmem:[#allocation3 + $0x2c] sm:$0xf] %vm1731, %v1706
        %1744 = vst.msk [vmem:[#allocation3 + $0x30] sm:$0xf] %vm1731, %v1708
        %1745 = vst.msk [vmem:[#allocation3 + $0x34] sm:$0xf] %vm1731, %v1710
        %1746 = vst.msk [vmem:[#allocation3 + $0x38] sm:$0xf] %vm1731, %v1712
        %1747 = vst.msk [vmem:[#allocation3 + $0x3c] sm:$0xf] %vm1731, %v1714
        %v1748 = vld [vmem:[%s1019] sm:$0xe]
        %v1749 = vld [vmem:[%s1019 + $0x4] sm:$0xf]
        %v1750 = vld [vmem:[%s1019 + $0x8] sm:$0x1]
        %v1751 = vld [vmem:[%s1019 + $0xc] sm:$0xe]
        %v1752 = vld [vmem:[%s1019 + $0x10] sm:$0xf]
        %v1753 = vld [vmem:[%s1019 + $0x14] sm:$0x1]
        %v1754 = vld [vmem:[%s1019 + $0x18] sm:$0xe]
        %v1755 = vld [vmem:[%s1019 + $0x1c] sm:$0xf]
        %v1756 = vld [vmem:[%s1019 + $0x20] sm:$0x1]
        %v1757 = vld [vmem:[%s1019 + $0x24] sm:$0xe]
        %v1758 = vld [vmem:[%s1019 + $0x28] sm:$0xf]
        %v1759 = vld [vmem:[%s1019 + $0x2c] sm:$0x1]
        %v1760 = vld [vmem:[%s1019 + $0x30] sm:$0xe]
        %v1761 = vld [vmem:[%s1019 + $0x34] sm:$0xf]
        %v1762 = vld [vmem:[%s1019 + $0x38] sm:$0x1]
        %v1763 = vld [vmem:[%s1019 + $0x3c] sm:$0xe]
        %v1764 = vld [vmem:[%s1019 + $0x40] sm:$0xf]
        %v1765 = vld [vmem:[%s1019 + $0x44] sm:$0x1]
        %v1766 = vld [vmem:[%s1019 + $0x48] sm:$0xe]
        %v1767 = vld [vmem:[%s1019 + $0x4c] sm:$0xf]
        %v1768 = vld [vmem:[%s1019 + $0x50] sm:$0x1]
        %v1769 = vld [vmem:[%s1019 + $0x54] sm:$0xe]
        %v1770 = vld [vmem:[%s1019 + $0x58] sm:$0xf]
        %v1771 = vld [vmem:[%s1019 + $0x5c] sm:$0x1]
        %v1796 = vrot.slane %v1748, 5
        %v1797 = vrot.slane %v1796, 4
        %v1798 = vrot.slane %v1749, 5
        %v1799 = vsel %vm1464, %v1797, %v1798
        %v1800 = vrot.slane %v1798, 4
        %v1801 = vrot.slane %v1750, 5
        %v1802 = vsel %vm1464, %v1800, %v1801
        %v1803 = vrot.slane %v1751, 5
        %v1804 = vrot.slane %v1803, 4
        %v1805 = vrot.slane %v1752, 5
        %v1806 = vsel %vm1464, %v1804, %v1805
        %v1807 = vrot.slane %v1805, 4
        %v1808 = vrot.slane %v1753, 5
        %v1809 = vsel %vm1464, %v1807, %v1808
        %v1810 = vrot.slane %v1754, 5
        %v1811 = vrot.slane %v1810, 4
        %v1812 = vrot.slane %v1755, 5
        %v1813 = vsel %vm1464, %v1811, %v1812
        %v1814 = vrot.slane %v1812, 4
        %v1815 = vrot.slane %v1756, 5
        %v1816 = vsel %vm1464, %v1814, %v1815
        %v1817 = vrot.slane %v1757, 5
        %v1818 = vrot.slane %v1817, 4
        %v1819 = vrot.slane %v1758, 5
        %v1820 = vsel %vm1464, %v1818, %v1819
        %v1821 = vrot.slane %v1819, 4
        %v1822 = vrot.slane %v1759, 5
        %v1823 = vsel %vm1464, %v1821, %v1822
        %v1824 = vrot.slane %v1760, 5
        %v1825 = vrot.slane %v1824, 4
        %v1826 = vrot.slane %v1761, 5
        %v1827 = vsel %vm1464, %v1825, %v1826
        %v1828 = vrot.slane %v1826, 4
        %v1829 = vrot.slane %v1762, 5
        %v1830 = vsel %vm1464, %v1828, %v1829
        %v1831 = vrot.slane %v1763, 5
        %v1832 = vrot.slane %v1831, 4
        %v1833 = vrot.slane %v1764, 5
        %v1834 = vsel %vm1464, %v1832, %v1833
        %v1835 = vrot.slane %v1833, 4
        %v1836 = vrot.slane %v1765, 5
        %v1837 = vsel %vm1464, %v1835, %v1836
        %v1838 = vrot.slane %v1766, 5
        %v1839 = vrot.slane %v1838, 4
        %v1840 = vrot.slane %v1767, 5
        %v1841 = vsel %vm1464, %v1839, %v1840
        %v1842 = vrot.slane %v1840, 4
        %v1843 = vrot.slane %v1768, 5
        %v1844 = vsel %vm1464, %v1842, %v1843
        %v1845 = vrot.slane %v1769, 5
        %v1846 = vrot.slane %v1845, 4
        %v1847 = vrot.slane %v1770, 5
        %v1848 = vsel %vm1464, %v1846, %v1847
        %v1849 = vrot.slane %v1847, 4
        %v1850 = vrot.slane %v1771, 5
        %v1851 = vsel %vm1464, %v1849, %v1850
        %1852 = vrot.lane.b32.xlu0 %v1799, 20
        %v1853 = vpop.permute.xlu0 %1852
        %1854 = vrot.lane.b32.xlu0 %v1802, 20
        %v1855 = vpop.permute.xlu0 %1854
        %1856 = vrot.lane.b32.xlu0 %v1806, 20
        %v1857 = vpop.permute.xlu0 %1856
        %1858 = vrot.lane.b32.xlu0 %v1809, 20
        %v1859 = vpop.permute.xlu0 %1858
        %1860 = vrot.lane.b32.xlu0 %v1813, 20
        %v1861 = vpop.permute.xlu0 %1860
        %1862 = vrot.lane.b32.xlu0 %v1816, 20
        %v1863 = vpop.permute.xlu0 %1862
        %1864 = vrot.lane.b32.xlu0 %v1820, 20
        %v1865 = vpop.permute.xlu0 %1864
        %1866 = vrot.lane.b32.xlu0 %v1823, 20
        %v1867 = vpop.permute.xlu0 %1866
        %1868 = vrot.lane.b32.xlu0 %v1827, 20
        %v1869 = vpop.permute.xlu0 %1868
        %1870 = vrot.lane.b32.xlu0 %v1830, 20
        %v1871 = vpop.permute.xlu0 %1870
        %1872 = vrot.lane.b32.xlu0 %v1834, 20
        %v1873 = vpop.permute.xlu0 %1872
        %1874 = vrot.lane.b32.xlu0 %v1837, 20
        %v1875 = vpop.permute.xlu0 %1874
        %1876 = vrot.lane.b32.xlu0 %v1841, 20
        %v1877 = vpop.permute.xlu0 %1876
        %1878 = vrot.lane.b32.xlu0 %v1844, 20
        %v1879 = vpop.permute.xlu0 %1878
        %1880 = vrot.lane.b32.xlu0 %v1848, 20
        %v1881 = vpop.permute.xlu0 %1880
        %1882 = vrot.lane.b32.xlu0 %v1851, 20
        %v1883 = vpop.permute.xlu0 %1882
        %vm1900 = vcmask 191648
        %1901 = vst.msk [vmem:[#allocation3] sm:$0xf] %vm1900, %v1853
        %1902 = vst.msk [vmem:[#allocation3 + $0x4] sm:$0xf] %vm1900, %v1855
        %1903 = vst.msk [vmem:[#allocation3 + $0x8] sm:$0xf] %vm1900, %v1857
        %1904 = vst.msk [vmem:[#allocation3 + $0xc] sm:$0xf] %vm1900, %v1859
        %1905 = vst.msk [vmem:[#allocation3 + $0x10] sm:$0xf] %vm1900, %v1861
        %1906 = vst.msk [vmem:[#allocation3 + $0x14] sm:$0xf] %vm1900, %v1863
        %1907 = vst.msk [vmem:[#allocation3 + $0x18] sm:$0xf] %vm1900, %v1865
        %1908 = vst.msk [vmem:[#allocation3 + $0x1c] sm:$0xf] %vm1900, %v1867
        %1909 = vst.msk [vmem:[#allocation3 + $0x20] sm:$0xf] %vm1900, %v1869
        %1910 = vst.msk [vmem:[#allocation3 + $0x24] sm:$0xf] %vm1900, %v1871
        %1911 = vst.msk [vmem:[#allocation3 + $0x28] sm:$0xf] %vm1900, %v1873
        %1912 = vst.msk [vmem:[#allocation3 + $0x2c] sm:$0xf] %vm1900, %v1875
        %1913 = vst.msk [vmem:[#allocation3 + $0x30] sm:$0xf] %vm1900, %v1877
        %1914 = vst.msk [vmem:[#allocation3 + $0x34] sm:$0xf] %vm1900, %v1879
        %1915 = vst.msk [vmem:[#allocation3 + $0x38] sm:$0xf] %vm1900, %v1881
        %1916 = vst.msk [vmem:[#allocation3 + $0x3c] sm:$0xf] %vm1900, %v1883
        %s1917 = scalar_lea.vmem [#allocation2], 24
        %v1918 = vld [vmem:[%s1917] sm:$0xf]
        %v1919 = vld [vmem:[%s1917 + $0x4] sm:$0xf]
        %v1920 = vld [vmem:[%s1917 + $0xc] sm:$0xf]
        %v1921 = vld [vmem:[%s1917 + $0x10] sm:$0xf]
        %v1922 = vld [vmem:[%s1917 + $0x18] sm:$0xf]
        %v1923 = vld [vmem:[%s1917 + $0x1c] sm:$0xf]
        %v1924 = vld [vmem:[%s1917 + $0x24] sm:$0xf]
        %v1925 = vld [vmem:[%s1917 + $0x28] sm:$0xf]
        %v1926 = vld [vmem:[%s1917 + $0x30] sm:$0xf]
        %v1927 = vld [vmem:[%s1917 + $0x34] sm:$0xf]
        %v1928 = vld [vmem:[%s1917 + $0x3c] sm:$0xf]
        %v1929 = vld [vmem:[%s1917 + $0x40] sm:$0xf]
        %v1930 = vld [vmem:[%s1917 + $0x48] sm:$0xf]
        %v1931 = vld [vmem:[%s1917 + $0x4c] sm:$0xf]
        %v1932 = vld [vmem:[%s1917 + $0x54] sm:$0xf]
        %v1933 = vld [vmem:[%s1917 + $0x58] sm:$0xf]
        %1950 = vrot.lane.b32.xlu0 %v1918, 24
        %v1951 = vpop.permute.xlu0 %1950
        %1952 = vrot.lane.b32.xlu0 %v1919, 24
        %v1953 = vpop.permute.xlu0 %1952
        %1954 = vrot.lane.b32.xlu0 %v1920, 24
        %v1955 = vpop.permute.xlu0 %1954
        %1956 = vrot.lane.b32.xlu0 %v1921, 24
        %v1957 = vpop.permute.xlu0 %1956
        %1958 = vrot.lane.b32.xlu0 %v1922, 24
        %v1959 = vpop.permute.xlu0 %1958
        %1960 = vrot.lane.b32.xlu0 %v1923, 24
        %v1961 = vpop.permute.xlu0 %1960
        %1962 = vrot.lane.b32.xlu0 %v1924, 24
        %v1963 = vpop.permute.xlu0 %1962
        %1964 = vrot.lane.b32.xlu0 %v1925, 24
        %v1965 = vpop.permute.xlu0 %1964
        %1966 = vrot.lane.b32.xlu0 %v1926, 24
        %v1967 = vpop.permute.xlu0 %1966
        %1968 = vrot.lane.b32.xlu0 %v1927, 24
        %v1969 = vpop.permute.xlu0 %1968
        %1970 = vrot.lane.b32.xlu0 %v1928, 24
        %v1971 = vpop.permute.xlu0 %1970
        %1972 = vrot.lane.b32.xlu0 %v1929, 24
        %v1973 = vpop.permute.xlu0 %1972
        %1974 = vrot.lane.b32.xlu0 %v1930, 24
        %v1975 = vpop.permute.xlu0 %1974
        %1976 = vrot.lane.b32.xlu0 %v1931, 24
        %v1977 = vpop.permute.xlu0 %1976
        %1978 = vrot.lane.b32.xlu0 %v1932, 24
        %v1979 = vpop.permute.xlu0 %1978
        %1980 = vrot.lane.b32.xlu0 %v1933, 24
        %v1981 = vpop.permute.xlu0 %1980
        %vm1998 = vcmask 224448
        %1999 = vst.msk [vmem:[#allocation3] sm:$0xf] %vm1998, %v1951
        %2000 = vst.msk [vmem:[#allocation3 + $0x4] sm:$0xf] %vm1998, %v1953
        %2001 = vst.msk [vmem:[#allocation3 + $0x8] sm:$0xf] %vm1998, %v1955
        %2002 = vst.msk [vmem:[#allocation3 + $0xc] sm:$0xf] %vm1998, %v1957
        %2003 = vst.msk [vmem:[#allocation3 + $0x10] sm:$0xf] %vm1998, %v1959
        %2004 = vst.msk [vmem:[#allocation3 + $0x14] sm:$0xf] %vm1998, %v1961
        %2005 = vst.msk [vmem:[#allocation3 + $0x18] sm:$0xf] %vm1998, %v1963
        %2006 = vst.msk [vmem:[#allocation3 + $0x1c] sm:$0xf] %vm1998, %v1965
        %2007 = vst.msk [vmem:[#allocation3 + $0x20] sm:$0xf] %vm1998, %v1967
        %2008 = vst.msk [vmem:[#allocation3 + $0x24] sm:$0xf] %vm1998, %v1969
        %2009 = vst.msk [vmem:[#allocation3 + $0x28] sm:$0xf] %vm1998, %v1971
        %2010 = vst.msk [vmem:[#allocation3 + $0x2c] sm:$0xf] %vm1998, %v1973
        %2011 = vst.msk [vmem:[#allocation3 + $0x30] sm:$0xf] %vm1998, %v1975
        %2012 = vst.msk [vmem:[#allocation3 + $0x34] sm:$0xf] %vm1998, %v1977
        %2013 = vst.msk [vmem:[#allocation3 + $0x38] sm:$0xf] %vm1998, %v1979
        %2014 = vst.msk [vmem:[#allocation3 + $0x3c] sm:$0xf] %vm1998, %v1981
        %v2015 = vld [vmem:[%s1917] sm:$0xf]
        %v2016 = vld [vmem:[%s1917 + $0x4] sm:$0xf]
        %v2017 = vld [vmem:[%s1917 + $0x8] sm:$0x1]
        %v2018 = vld [vmem:[%s1917 + $0xc] sm:$0xf]
        %v2019 = vld [vmem:[%s1917 + $0x10] sm:$0xf]
        %v2020 = vld [vmem:[%s1917 + $0x14] sm:$0x1]
        %v2021 = vld [vmem:[%s1917 + $0x18] sm:$0xf]
        %v2022 = vld [vmem:[%s1917 + $0x1c] sm:$0xf]
        %v2023 = vld [vmem:[%s1917 + $0x20] sm:$0x1]
        %v2024 = vld [vmem:[%s1917 + $0x24] sm:$0xf]
        %v2025 = vld [vmem:[%s1917 + $0x28] sm:$0xf]
        %v2026 = vld [vmem:[%s1917 + $0x2c] sm:$0x1]
        %v2027 = vld [vmem:[%s1917 + $0x30] sm:$0xf]
        %v2028 = vld [vmem:[%s1917 + $0x34] sm:$0xf]
        %v2029 = vld [vmem:[%s1917 + $0x38] sm:$0x1]
        %v2030 = vld [vmem:[%s1917 + $0x3c] sm:$0xf]
        %v2031 = vld [vmem:[%s1917 + $0x40] sm:$0xf]
        %v2032 = vld [vmem:[%s1917 + $0x44] sm:$0x1]
        %v2033 = vld [vmem:[%s1917 + $0x48] sm:$0xf]
        %v2034 = vld [vmem:[%s1917 + $0x4c] sm:$0xf]
        %v2035 = vld [vmem:[%s1917 + $0x50] sm:$0x1]
        %v2036 = vld [vmem:[%s1917 + $0x54] sm:$0xf]
        %v2037 = vld [vmem:[%s1917 + $0x58] sm:$0xf]
        %v2038 = vld [vmem:[%s1917 + $0x5c] sm:$0x1]
        %v2040 = vshrl.u32 %v2015, 16
        %v2042 = vrot.slane %v2040, 4
        %v2043 = vshll.u32 %v2015, 16
        %v2045 = vrot.slane %v2043, 5
        %v2046 = vor.u32 %v2042, %v2045
        %v2047 = vrot.slane %v2046, 4
        %v2049 = vshll.u32 %v2016, 16
        %v2051 = vrot.slane %v2049, 5
        %v2052 = vsel %vm1156, %v2047, %v2051
        %v2053 = vshrl.u32 %v2016, 16
        %v2055 = vrot.slane %v2053, 4
        %v2056 = vor.u32 %v2055, %v2051
        %v2057 = vrot.slane %v2056, 4
        %v2059 = vshll.u32 %v2017, 16
        %v2061 = vrot.slane %v2059, 5
        %v2062 = vsel %vm1156, %v2057, %v2061
        %v2064 = vshrl.u32 %v2018, 16
        %v2066 = vrot.slane %v2064, 4
        %v2067 = vshll.u32 %v2018, 16
        %v2069 = vrot.slane %v2067, 5
        %v2070 = vor.u32 %v2066, %v2069
        %v2071 = vrot.slane %v2070, 4
        %v2073 = vshll.u32 %v2019, 16
        %v2075 = vrot.slane %v2073, 5
        %v2076 = vsel %vm1156, %v2071, %v2075
        %v2077 = vshrl.u32 %v2019, 16
        %v2079 = vrot.slane %v2077, 4
        %v2080 = vor.u32 %v2079, %v2075
        %v2081 = vrot.slane %v2080, 4
        %v2083 = vshll.u32 %v2020, 16
        %v2085 = vrot.slane %v2083, 5
        %v2086 = vsel %vm1156, %v2081, %v2085
        %v2088 = vshrl.u32 %v2021, 16
        %v2090 = vrot.slane %v2088, 4
        %v2091 = vshll.u32 %v2021, 16
        %v2093 = vrot.slane %v2091, 5
        %v2094 = vor.u32 %v2090, %v2093
        %v2095 = vrot.slane %v2094, 4
        %v2097 = vshll.u32 %v2022, 16
        %v2099 = vrot.slane %v2097, 5
        %v2100 = vsel %vm1156, %v2095, %v2099
        %v2101 = vshrl.u32 %v2022, 16
        %v2103 = vrot.slane %v2101, 4
        %v2104 = vor.u32 %v2103, %v2099
        %v2105 = vrot.slane %v2104, 4
        %v2107 = vshll.u32 %v2023, 16
        %v2109 = vrot.slane %v2107, 5
        %v2110 = vsel %vm1156, %v2105, %v2109
        %v2112 = vshrl.u32 %v2024, 16
        %v2114 = vrot.slane %v2112, 4
        %v2115 = vshll.u32 %v2024, 16
        %v2117 = vrot.slane %v2115, 5
        %v2118 = vor.u32 %v2114, %v2117
        %v2119 = vrot.slane %v2118, 4
        %v2121 = vshll.u32 %v2025, 16
        %v2123 = vrot.slane %v2121, 5
        %v2124 = vsel %vm1156, %v2119, %v2123
        %v2125 = vshrl.u32 %v2025, 16
        %v2127 = vrot.slane %v2125, 4
        %v2128 = vor.u32 %v2127, %v2123
        %v2129 = vrot.slane %v2128, 4
        %v2131 = vshll.u32 %v2026, 16
        %v2133 = vrot.slane %v2131, 5
        %v2134 = vsel %vm1156, %v2129, %v2133
        %v2136 = vshrl.u32 %v2027, 16
        %v2138 = vrot.slane %v2136, 4
        %v2139 = vshll.u32 %v2027, 16
        %v2141 = vrot.slane %v2139, 5
        %v2142 = vor.u32 %v2138, %v2141
        %v2143 = vrot.slane %v2142, 4
        %v2145 = vshll.u32 %v2028, 16
        %v2147 = vrot.slane %v2145, 5
        %v2148 = vsel %vm1156, %v2143, %v2147
        %v2149 = vshrl.u32 %v2028, 16
        %v2151 = vrot.slane %v2149, 4
        %v2152 = vor.u32 %v2151, %v2147
        %v2153 = vrot.slane %v2152, 4
        %v2155 = vshll.u32 %v2029, 16
        %v2157 = vrot.slane %v2155, 5
        %v2158 = vsel %vm1156, %v2153, %v2157
        %v2160 = vshrl.u32 %v2030, 16
        %v2162 = vrot.slane %v2160, 4
        %v2163 = vshll.u32 %v2030, 16
        %v2165 = vrot.slane %v2163, 5
        %v2166 = vor.u32 %v2162, %v2165
        %v2167 = vrot.slane %v2166, 4
        %v2169 = vshll.u32 %v2031, 16
        %v2171 = vrot.slane %v2169, 5
        %v2172 = vsel %vm1156, %v2167, %v2171
        %v2173 = vshrl.u32 %v2031, 16
        %v2175 = vrot.slane %v2173, 4
        %v2176 = vor.u32 %v2175, %v2171
        %v2177 = vrot.slane %v2176, 4
        %v2179 = vshll.u32 %v2032, 16
        %v2181 = vrot.slane %v2179, 5
        %v2182 = vsel %vm1156, %v2177, %v2181
        %v2184 = vshrl.u32 %v2033, 16
        %v2186 = vrot.slane %v2184, 4
        %v2187 = vshll.u32 %v2033, 16
        %v2189 = vrot.slane %v2187, 5
        %v2190 = vor.u32 %v2186, %v2189
        %v2191 = vrot.slane %v2190, 4
        %v2193 = vshll.u32 %v2034, 16
        %v2195 = vrot.slane %v2193, 5
        %v2196 = vsel %vm1156, %v2191, %v2195
        %v2197 = vshrl.u32 %v2034, 16
        %v2199 = vrot.slane %v2197, 4
        %v2200 = vor.u32 %v2199, %v2195
        %v2201 = vrot.slane %v2200, 4
        %v2203 = vshll.u32 %v2035, 16
        %v2205 = vrot.slane %v2203, 5
        %v2206 = vsel %vm1156, %v2201, %v2205
        %v2208 = vshrl.u32 %v2036, 16
        %v2210 = vrot.slane %v2208, 4
        %v2211 = vshll.u32 %v2036, 16
        %v2213 = vrot.slane %v2211, 5
        %v2214 = vor.u32 %v2210, %v2213
        %v2215 = vrot.slane %v2214, 4
        %v2217 = vshll.u32 %v2037, 16
        %v2219 = vrot.slane %v2217, 5
        %v2220 = vsel %vm1156, %v2215, %v2219
        %v2221 = vshrl.u32 %v2037, 16
        %v2223 = vrot.slane %v2221, 4
        %v2224 = vor.u32 %v2223, %v2219
        %v2225 = vrot.slane %v2224, 4
        %v2227 = vshll.u32 %v2038, 16
        %v2229 = vrot.slane %v2227, 5
        %v2230 = vsel %vm1156, %v2225, %v2229
        %2231 = vrot.lane.b32.xlu0 %v2052, 28
        %v2232 = vpop.permute.xlu0 %2231
        %2233 = vrot.lane.b32.xlu0 %v2062, 28
        %v2234 = vpop.permute.xlu0 %2233
        %2235 = vrot.lane.b32.xlu0 %v2076, 28
        %v2236 = vpop.permute.xlu0 %2235
        %2237 = vrot.lane.b32.xlu0 %v2086, 28
        %v2238 = vpop.permute.xlu0 %2237
        %2239 = vrot.lane.b32.xlu0 %v2100, 28
        %v2240 = vpop.permute.xlu0 %2239
        %2241 = vrot.lane.b32.xlu0 %v2110, 28
        %v2242 = vpop.permute.xlu0 %2241
        %2243 = vrot.lane.b32.xlu0 %v2124, 28
        %v2244 = vpop.permute.xlu0 %2243
        %2245 = vrot.lane.b32.xlu0 %v2134, 28
        %v2246 = vpop.permute.xlu0 %2245
        %2247 = vrot.lane.b32.xlu0 %v2148, 28
        %v2248 = vpop.permute.xlu0 %2247
        %2249 = vrot.lane.b32.xlu0 %v2158, 28
        %v2250 = vpop.permute.xlu0 %2249
        %2251 = vrot.lane.b32.xlu0 %v2172, 28
        %v2252 = vpop.permute.xlu0 %2251
        %2253 = vrot.lane.b32.xlu0 %v2182, 28
        %v2254 = vpop.permute.xlu0 %2253
        %2255 = vrot.lane.b32.xlu0 %v2196, 28
        %v2256 = vpop.permute.xlu0 %2255
        %2257 = vrot.lane.b32.xlu0 %v2206, 28
        %v2258 = vpop.permute.xlu0 %2257
        %2259 = vrot.lane.b32.xlu0 %v2220, 28
        %v2260 = vpop.permute.xlu0 %2259
        %2261 = vrot.lane.b32.xlu0 %v2230, 28
        %v2262 = vpop.permute.xlu0 %2261
        %vm2279 = vcmask 257248
        %2280 = vst.msk [vmem:[#allocation3] sm:$0xf] %vm2279, %v2232
        %2281 = vst.msk [vmem:[#allocation3 + $0x4] sm:$0xf] %vm2279, %v2234
        %2282 = vst.msk [vmem:[#allocation3 + $0x8] sm:$0xf] %vm2279, %v2236
        %2283 = vst.msk [vmem:[#allocation3 + $0xc] sm:$0xf] %vm2279, %v2238
        %2284 = vst.msk [vmem:[#allocation3 + $0x10] sm:$0xf] %vm2279, %v2240
        %2285 = vst.msk [vmem:[#allocation3 + $0x14] sm:$0xf] %vm2279, %v2242
        %2286 = vst.msk [vmem:[#allocation3 + $0x18] sm:$0xf] %vm2279, %v2244
        %2287 = vst.msk [vmem:[#allocation3 + $0x1c] sm:$0xf] %vm2279, %v2246
        %2288 = vst.msk [vmem:[#allocation3 + $0x20] sm:$0xf] %vm2279, %v2248
        %2289 = vst.msk [vmem:[#allocation3 + $0x24] sm:$0xf] %vm2279, %v2250
        %2290 = vst.msk [vmem:[#allocation3 + $0x28] sm:$0xf] %vm2279, %v2252
        %2291 = vst.msk [vmem:[#allocation3 + $0x2c] sm:$0xf] %vm2279, %v2254
        %2292 = vst.msk [vmem:[#allocation3 + $0x30] sm:$0xf] %vm2279, %v2256
        %2293 = vst.msk [vmem:[#allocation3 + $0x34] sm:$0xf] %vm2279, %v2258
        %2294 = vst.msk [vmem:[#allocation3 + $0x38] sm:$0xf] %vm2279, %v2260
        %2295 = vst.msk [vmem:[#allocation3 + $0x3c] sm:$0xf] %vm2279, %v2262
        %v2296 = vld [vmem:[%s1917] sm:$0xe]
        %v2297 = vld [vmem:[%s1917 + $0x4] sm:$0xf]
        %v2298 = vld [vmem:[%s1917 + $0x8] sm:$0x1]
        %v2299 = vld [vmem:[%s1917 + $0xc] sm:$0xe]
        %v2300 = vld [vmem:[%s1917 + $0x10] sm:$0xf]
        %v2301 = vld [vmem:[%s1917 + $0x14] sm:$0x1]
        %v2302 = vld [vmem:[%s1917 + $0x18] sm:$0xe]
        %v2303 = vld [vmem:[%s1917 + $0x1c] sm:$0xf]
        %v2304 = vld [vmem:[%s1917 + $0x20] sm:$0x1]
        %v2305 = vld [vmem:[%s1917 + $0x24] sm:$0xe]
        %v2306 = vld [vmem:[%s1917 + $0x28] sm:$0xf]
        %v2307 = vld [vmem:[%s1917 + $0x2c] sm:$0x1]
        %v2308 = vld [vmem:[%s1917 + $0x30] sm:$0xe]
        %v2309 = vld [vmem:[%s1917 + $0x34] sm:$0xf]
        %v2310 = vld [vmem:[%s1917 + $0x38] sm:$0x1]
        %v2311 = vld [vmem:[%s1917 + $0x3c] sm:$0xe]
        %v2312 = vld [vmem:[%s1917 + $0x40] sm:$0xf]
        %v2313 = vld [vmem:[%s1917 + $0x44] sm:$0x1]
        %v2314 = vld [vmem:[%s1917 + $0x48] sm:$0xe]
        %v2315 = vld [vmem:[%s1917 + $0x4c] sm:$0xf]
        %v2316 = vld [vmem:[%s1917 + $0x50] sm:$0x1]
        %v2317 = vld [vmem:[%s1917 + $0x54] sm:$0xe]
        %v2318 = vld [vmem:[%s1917 + $0x58] sm:$0xf]
        %v2319 = vld [vmem:[%s1917 + $0x5c] sm:$0x1]
        %v2344 = vrot.slane %v2296, 5
        %v2345 = vrot.slane %v2344, 4
        %v2346 = vrot.slane %v2297, 5
        %v2347 = vsel %vm1464, %v2345, %v2346
        %v2348 = vrot.slane %v2346, 4
        %v2349 = vrot.slane %v2298, 5
        %v2350 = vsel %vm1464, %v2348, %v2349
        %v2351 = vrot.slane %v2299, 5
        %v2352 = vrot.slane %v2351, 4
        %v2353 = vrot.slane %v2300, 5
        %v2354 = vsel %vm1464, %v2352, %v2353
        %v2355 = vrot.slane %v2353, 4
        %v2356 = vrot.slane %v2301, 5
        %v2357 = vsel %vm1464, %v2355, %v2356
        %v2358 = vrot.slane %v2302, 5
        %v2359 = vrot.slane %v2358, 4
        %v2360 = vrot.slane %v2303, 5
        %v2361 = vsel %vm1464, %v2359, %v2360
        %v2362 = vrot.slane %v2360, 4
        %v2363 = vrot.slane %v2304, 5
        %v2364 = vsel %vm1464, %v2362, %v2363
        %v2365 = vrot.slane %v2305, 5
        %v2366 = vrot.slane %v2365, 4
        %v2367 = vrot.slane %v2306, 5
        %v2368 = vsel %vm1464, %v2366, %v2367
        %v2369 = vrot.slane %v2367, 4
        %v2370 = vrot.slane %v2307, 5
        %v2371 = vsel %vm1464, %v2369, %v2370
        %v2372 = vrot.slane %v2308, 5
        %v2373 = vrot.slane %v2372, 4
        %v2374 = vrot.slane %v2309, 5
        %v2375 = vsel %vm1464, %v2373, %v2374
        %v2376 = vrot.slane %v2374, 4
        %v2377 = vrot.slane %v2310, 5
        %v2378 = vsel %vm1464, %v2376, %v2377
        %v2379 = vrot.slane %v2311, 5
        %v2380 = vrot.slane %v2379, 4
        %v2381 = vrot.slane %v2312, 5
        %v2382 = vsel %vm1464, %v2380, %v2381
        %v2383 = vrot.slane %v2381, 4
        %v2384 = vrot.slane %v2313, 5
        %v2385 = vsel %vm1464, %v2383, %v2384
        %v2386 = vrot.slane %v2314, 5
        %v2387 = vrot.slane %v2386, 4
        %v2388 = vrot.slane %v2315, 5
        %v2389 = vsel %vm1464, %v2387, %v2388
        %v2390 = vrot.slane %v2388, 4
        %v2391 = vrot.slane %v2316, 5
        %v2392 = vsel %vm1464, %v2390, %v2391
        %v2393 = vrot.slane %v2317, 5
        %v2394 = vrot.slane %v2393, 4
        %v2395 = vrot.slane %v2318, 5
        %v2396 = vsel %vm1464, %v2394, %v2395
        %v2397 = vrot.slane %v2395, 4
        %v2398 = vrot.slane %v2319, 5
        %v2399 = vsel %vm1464, %v2397, %v2398
        %2400 = vrot.lane.b32.xlu0 %v2347, 32
        %v2401 = vpop.permute.xlu0 %2400
        %2402 = vrot.lane.b32.xlu0 %v2350, 32
        %v2403 = vpop.permute.xlu0 %2402
        %2404 = vrot.lane.b32.xlu0 %v2354, 32
        %v2405 = vpop.permute.xlu0 %2404
        %2406 = vrot.lane.b32.xlu0 %v2357, 32
        %v2407 = vpop.permute.xlu0 %2406
        %2408 = vrot.lane.b32.xlu0 %v2361, 32
        %v2409 = vpop.permute.xlu0 %2408
        %2410 = vrot.lane.b32.xlu0 %v2364, 32
        %v2411 = vpop.permute.xlu0 %2410
        %2412 = vrot.lane.b32.xlu0 %v2368, 32
        %v2413 = vpop.permute.xlu0 %2412
        %2414 = vrot.lane.b32.xlu0 %v2371, 32
        %v2415 = vpop.permute.xlu0 %2414
        %2416 = vrot.lane.b32.xlu0 %v2375, 32
        %v2417 = vpop.permute.xlu0 %2416
        %2418 = vrot.lane.b32.xlu0 %v2378, 32
        %v2419 = vpop.permute.xlu0 %2418
        %2420 = vrot.lane.b32.xlu0 %v2382, 32
        %v2421 = vpop.permute.xlu0 %2420
        %2422 = vrot.lane.b32.xlu0 %v2385, 32
        %v2423 = vpop.permute.xlu0 %2422
        %2424 = vrot.lane.b32.xlu0 %v2389, 32
        %v2425 = vpop.permute.xlu0 %2424
        %2426 = vrot.lane.b32.xlu0 %v2392, 32
        %v2427 = vpop.permute.xlu0 %2426
        %2428 = vrot.lane.b32.xlu0 %v2396, 32
        %v2429 = vpop.permute.xlu0 %2428
        %2430 = vrot.lane.b32.xlu0 %v2399, 32
        %v2431 = vpop.permute.xlu0 %2430
        %vm2448 = vcmask 290048
        %2449 = vst.msk [vmem:[#allocation3] sm:$0xf] %vm2448, %v2401
        %2450 = vst.msk [vmem:[#allocation3 + $0x4] sm:$0xf] %vm2448, %v2403
        %2451 = vst.msk [vmem:[#allocation3 + $0x8] sm:$0xf] %vm2448, %v2405
        %2452 = vst.msk [vmem:[#allocation3 + $0xc] sm:$0xf] %vm2448, %v2407
        %2453 = vst.msk [vmem:[#allocation3 + $0x10] sm:$0xf] %vm2448, %v2409
        %2454 = vst.msk [vmem:[#allocation3 + $0x14] sm:$0xf] %vm2448, %v2411
        %2455 = vst.msk [vmem:[#allocation3 + $0x18] sm:$0xf] %vm2448, %v2413
        %2456 = vst.msk [vmem:[#allocation3 + $0x1c] sm:$0xf] %vm2448, %v2415
        %2457 = vst.msk [vmem:[#allocation3 + $0x20] sm:$0xf] %vm2448, %v2417
        %2458 = vst.msk [vmem:[#allocation3 + $0x24] sm:$0xf] %vm2448, %v2419
        %2459 = vst.msk [vmem:[#allocation3 + $0x28] sm:$0xf] %vm2448, %v2421
        %2460 = vst.msk [vmem:[#allocation3 + $0x2c] sm:$0xf] %vm2448, %v2423
        %2461 = vst.msk [vmem:[#allocation3 + $0x30] sm:$0xf] %vm2448, %v2425
        %2462 = vst.msk [vmem:[#allocation3 + $0x34] sm:$0xf] %vm2448, %v2427
        %2463 = vst.msk [vmem:[#allocation3 + $0x38] sm:$0xf] %vm2448, %v2429
        %2464 = vst.msk [vmem:[#allocation3 + $0x3c] sm:$0xf] %vm2448, %v2431
        %v2465 = vld [vmem:[#allocation3] sm:$0xf]
        %v2466 = vld [vmem:[#allocation3 + $0x4] sm:$0xf]
        %v2467 = vld [vmem:[#allocation3 + $0x8] sm:$0xf]
        %v2468 = vld [vmem:[#allocation3 + $0xc] sm:$0xf]
        %v2469 = vld [vmem:[#allocation3 + $0x10] sm:$0xf]
        %v2470 = vld [vmem:[#allocation3 + $0x14] sm:$0xf]
        %v2471 = vld [vmem:[#allocation3 + $0x18] sm:$0xf]
        %v2472 = vld [vmem:[#allocation3 + $0x1c] sm:$0xf]
        %v2473 = vld [vmem:[#allocation3 + $0x20] sm:$0xf]
        %v2474 = vld [vmem:[#allocation3 + $0x24] sm:$0xf]
        %v2475 = vld [vmem:[#allocation3 + $0x28] sm:$0xf]
        %v2476 = vld [vmem:[#allocation3 + $0x2c] sm:$0xf]
        %v2477 = vld [vmem:[#allocation3 + $0x30] sm:$0xf]
        %v2478 = vld [vmem:[#allocation3 + $0x34] sm:$0xf]
        %v2479 = vld [vmem:[#allocation3 + $0x38] sm:$0xf]
        %v2480 = vld [vmem:[#allocation3 + $0x3c] sm:$0xf]
        %v2481 = vld [vmem:[%s4] sm:$0xf]
        %v2482 = vld [vmem:[%s4 + $0x4] sm:$0xf]
        %v2483 = vld [vmem:[%s4 + $0x8] sm:$0xf]
        %v2484 = vld [vmem:[%s4 + $0xc] sm:$0xf]
        %v2485 = vld [vmem:[%s4 + $0x10] sm:$0x3]
        %v2486 = vld [vmem:[%s5] sm:$0x1]
        %v2488 = vlaneseq
        %v2489 = vshrl.u32 %v2488, 7
        %v2490 = vsub.s32 0, %v2489
        %v2491 = vrot.slane %v2486, %v2490
        %v2509 = vunpack.c.l.b16 %v2465
        %v2510 = vunpack.c.l.b16 %v2466
        %v2511 = vunpack.c.l.b16 %v2467
        %v2512 = vunpack.c.l.b16 %v2468
        %v2513 = vunpack.c.l.b16 %v2469
        %v2514 = vunpack.c.l.b16 %v2470
        %v2515 = vunpack.c.l.b16 %v2471
        %v2516 = vunpack.c.l.b16 %v2472
        %v2517 = vunpack.c.l.b16 %v2473
        %v2518 = vunpack.c.l.b16 %v2474
        %v2519 = vunpack.c.l.b16 %v2475
        %v2520 = vunpack.c.l.b16 %v2476
        %v2521 = vunpack.c.l.b16 %v2477
        %v2522 = vunpack.c.l.b16 %v2478
        %v2523 = vunpack.c.l.b16 %v2479
        %v2524 = vunpack.c.l.b16 %v2480
        %v2525 = vpack.c.b16 %v2510, %v2509
        %v2526 = vpack.c.b16 %v2512, %v2511
        %v2527 = vpack.c.b16 %v2514, %v2513
        %v2528 = vpack.c.b16 %v2516, %v2515
        %v2529 = vpack.c.b16 %v2518, %v2517
        %v2530 = vpack.c.b16 %v2520, %v2519
        %v2531 = vpack.c.b16 %v2522, %v2521
        %v2532 = vpack.c.b16 %v2524, %v2523
        %v2538 = vunpack.c.l.b16 %v2481
        %v2539 = vunpack.c.l.b16 %v2482
        %v2540 = vunpack.c.l.b16 %v2483
        %v2541 = vunpack.c.l.b16 %v2484
        %v2542 = vunpack.c.l.b16 %v2485
        %v2543 = vpack.c.b16 %v2539, %v2538
        %v2544 = vpack.c.b16 %v2541, %v2540
        %v2545 = vpack.c.b16 %v2542, %v2542
        %vm2548 = vcmask 293888
        %v2550 = vsel %vm2548, %v2525, 0
        %v2553 = vsel %vm2548, %v2526, 0
        %v2556 = vsel %vm2548, %v2527, 0
        %v2559 = vsel %vm2548, %v2528, 0
        %v2562 = vsel %vm2548, %v2529, 0
        %v2565 = vsel %vm2548, %v2530, 0
        %v2568 = vsel %vm2548, %v2531, 0
        %v2571 = vsel %vm2548, %v2532, 0
        %vm2573 = vcmask 1041408
        %v2575 = vsel %vm2573, %v2545, 0
        %2577 = vmatprep.subr.bf16.mxu0 0
        %2578 = vmatpush1.bf16.msra.mxu0 0
        %2579 = vmatprep.subr.bf16.mxu0 0
        %2580 = vmatpush1.bf16.msra.mxu0 0
        %2581 = vmatprep.subr.bf16.mxu0 0
        %2582 = vmatpush1.bf16.msra.mxu0 0
        %2583 = vmatprep.subr.bf16.mxu0 0
        %2584 = vmatpush1.bf16.msra.mxu0 0
        %2585 = vmatprep.subr.bf16.mxu0 0
        %2586 = vmatpush1.bf16.msra.mxu0 0
        %2587 = vmatprep.subr.bf16.mxu0 0
        %2588 = vmatpush1.bf16.msra.mxu0 %v2575
        %2589 = vmatprep.subr.bf16.mxu0 0
        %2590 = vmatpush1.bf16.msra.mxu0 %v2544
        %2591 = vmatprep.subr.bf16.mxu0 0
        %2592 = vmatpush1.bf16.msra.mxu0 %v2543
        %2593 = vmatprep.subr.bf16.mxu0 0
        %2594 = vmatpush2.bf16.msra.mxu0 0
        %2595 = vmatprep.subr.bf16.mxu0 0
        %2596 = vmatpush2.bf16.msra.mxu0 0
        %2597 = vmatprep.subr.bf16.mxu0 0
        %2598 = vmatpush2.bf16.msra.mxu0 0
        %2599 = vmatprep.subr.bf16.mxu0 0
        %2600 = vmatpush2.bf16.msra.mxu0 0
        %2601 = vmatprep.subr.bf16.mxu0 0
        %2602 = vmatpush2.bf16.msra.mxu0 0
        %2603 = vmatprep.subr.bf16.mxu0 0
        %2604 = vmatpush2.bf16.msra.mxu0 0
        %2605 = vmatprep.subr.bf16.mxu0 0
        %2606 = vmatpush2.bf16.msra.mxu0 0
        %2607 = vmatprep.subr.bf16.mxu0 0
        %2608 = vmatpush2.bf16.msra.mxu0 0
        %2609 = vmatprep.mubr.bf16.mxu0 0
        %2610 = vmatmul.mubr.bf16.gmra.mxu0 %v2550
        %v2611 = vpop.f32.mrf.mxu0
        %v2612 = vadd.f32 %v2491, %v2611
        %v2613 = vpop.f32.mrf.mxu0
        %v2614 = vpop.f32.mrf.mxu0
        %v2615 = vadd.f32 %v2491, %v2614
        %v2616 = vpop.f32.mrf.mxu0
        %2617 = vmatprep.mubr.bf16.mxu0 0
        %2618 = vmatmul.mubr.bf16.gmra.mxu0 %v2553
        %v2619 = vpop.f32.mrf.mxu0
        %v2620 = vadd.f32 %v2491, %v2619
        %v2621 = vpop.f32.mrf.mxu0
        %v2622 = vpop.f32.mrf.mxu0
        %v2623 = vadd.f32 %v2491, %v2622
        %v2624 = vpop.f32.mrf.mxu0
        %2625 = vmatprep.mubr.bf16.mxu0 0
        %2626 = vmatmul.mubr.bf16.gmra.mxu0 %v2556
        %v2627 = vpop.f32.mrf.mxu0
        %v2628 = vadd.f32 %v2491, %v2627
        %v2629 = vpop.f32.mrf.mxu0
        %v2630 = vpop.f32.mrf.mxu0
        %v2631 = vadd.f32 %v2491, %v2630
        %v2632 = vpop.f32.mrf.mxu0
        %2633 = vmatprep.mubr.bf16.mxu0 0
        %2634 = vmatmul.mubr.bf16.gmra.mxu0 %v2559
        %v2635 = vpop.f32.mrf.mxu0
        %v2636 = vadd.f32 %v2491, %v2635
        %v2637 = vpop.f32.mrf.mxu0
        %v2638 = vpop.f32.mrf.mxu0
        %v2639 = vadd.f32 %v2491, %v2638
        %v2640 = vpop.f32.mrf.mxu0
        %2641 = vmatprep.mubr.bf16.mxu0 0
        %2642 = vmatmul.mubr.bf16.gmra.mxu0 %v2562
        %v2643 = vpop.f32.mrf.mxu0
        %v2644 = vadd.f32 %v2491, %v2643
        %v2645 = vpop.f32.mrf.mxu0
        %v2646 = vpop.f32.mrf.mxu0
        %v2647 = vadd.f32 %v2491, %v2646
        %v2648 = vpop.f32.mrf.mxu0
        %2649 = vmatprep.mubr.bf16.mxu0 0
        %2650 = vmatmul.mubr.bf16.gmra.mxu0 %v2565
        %v2651 = vpop.f32.mrf.mxu0
        %v2652 = vadd.f32 %v2491, %v2651
        %v2653 = vpop.f32.mrf.mxu0
        %v2654 = vpop.f32.mrf.mxu0
        %v2655 = vadd.f32 %v2491, %v2654
        %v2656 = vpop.f32.mrf.mxu0
        %2657 = vmatprep.mubr.bf16.mxu0 0
        %2658 = vmatmul.mubr.bf16.gmra.mxu0 %v2568
        %v2659 = vpop.f32.mrf.mxu0
        %v2660 = vadd.f32 %v2491, %v2659
        %v2661 = vpop.f32.mrf.mxu0
        %v2662 = vpop.f32.mrf.mxu0
        %v2663 = vadd.f32 %v2491, %v2662
        %v2664 = vpop.f32.mrf.mxu0
        %2665 = vmatprep.mubr.bf16.mxu0 0
        %2666 = vmatmul.mubr.bf16.gmra.mxu0 %v2571
        %v2667 = vpop.f32.mrf.mxu0
        %v2668 = vadd.f32 %v2491, %v2667
        %v2669 = vpop.f32.mrf.mxu0
        %v2670 = vpop.f32.mrf.mxu0
        %v2671 = vadd.f32 %v2491, %v2670
        %v2672 = vpop.f32.mrf.mxu0
        %2673 = vdwg.mxu0
        %v2674 = vmax.f32 %v2612, 0.0
        %v2675 = vmax.f32 %v2615, 0.0
        %v2676 = vmax.f32 %v2620, 0.0
        %v2677 = vmax.f32 %v2623, 0.0
        %v2678 = vmax.f32 %v2628, 0.0
        %v2679 = vmax.f32 %v2631, 0.0
        %v2680 = vmax.f32 %v2636, 0.0
        %v2681 = vmax.f32 %v2639, 0.0
        %v2682 = vmax.f32 %v2644, 0.0
        %v2683 = vmax.f32 %v2647, 0.0
        %v2684 = vmax.f32 %v2652, 0.0
        %v2685 = vmax.f32 %v2655, 0.0
        %v2686 = vmax.f32 %v2660, 0.0
        %v2687 = vmax.f32 %v2663, 0.0
        %v2688 = vmax.f32 %v2668, 0.0
        %v2689 = vmax.f32 %v2671, 0.0
        %v2690 = vpack.c.bf16 %v2675, %v2674
        %v2691 = vpack.c.bf16 %v2677, %v2676
        %v2692 = vpack.c.bf16 %v2679, %v2678
        %v2693 = vpack.c.bf16 %v2681, %v2680
        %v2694 = vpack.c.bf16 %v2683, %v2682
        %v2695 = vpack.c.bf16 %v2685, %v2684
        %v2696 = vpack.c.bf16 %v2687, %v2686
        %v2697 = vpack.c.bf16 %v2689, %v2688
        %v2698 = vld [vmem:[%s6] sm:$0x3]
        %v2699 = vld [vmem:[%s7] sm:$0x1]
        %v2701 = vlaneseq
        %v2702 = vshrl.u32 %v2701, 7
        %v2703 = vsub.s32 0, %v2702
        %v2704 = vrot.slane %v2699, %v2703
        %vm2706 = vcmask 31744
        %v2708 = vsel %vm2706, %v2690, 0
        %v2711 = vsel %vm2706, %v2691, 0
        %v2714 = vsel %vm2706, %v2692, 0
        %v2717 = vsel %vm2706, %v2693, 0
        %v2720 = vsel %vm2706, %v2694, 0
        %v2723 = vsel %vm2706, %v2695, 0
        %v2726 = vsel %vm2706, %v2696, 0
        %v2729 = vsel %vm2706, %v2697, 0
        %v2732 = vsel %vm2573, %v2698, 0
        %2734 = vmatprep.subr.bf16.mxu0 0
        %2735 = vmatpush1.bf16.msra.mxu0 0
        %2736 = vmatprep.subr.bf16.mxu0 0
        %2737 = vmatpush1.bf16.msra.mxu0 0
        %2738 = vmatprep.subr.bf16.mxu0 0
        %2739 = vmatpush1.bf16.msra.mxu0 0
        %2740 = vmatprep.subr.bf16.mxu0 0
        %2741 = vmatpush1.bf16.msra.mxu0 0
        %2742 = vmatprep.subr.bf16.mxu0 0
        %2743 = vmatpush1.bf16.msra.mxu0 0
        %2744 = vmatprep.subr.bf16.mxu0 0
        %2745 = vmatpush1.bf16.msra.mxu0 0
        %2746 = vmatprep.subr.bf16.mxu0 0
        %2747 = vmatpush1.bf16.msra.mxu0 0
        %2748 = vmatprep.subr.bf16.mxu0 0
        %2749 = vmatpush1.bf16.msra.mxu0 %v2732
        %2750 = vmatprep.subr.bf16.mxu0 0
        %2751 = vmatpush2.bf16.msra.mxu0 0
        %2752 = vmatprep.subr.bf16.mxu0 0
        %2753 = vmatpush2.bf16.msra.mxu0 0
        %2754 = vmatprep.subr.bf16.mxu0 0
        %2755 = vmatpush2.bf16.msra.mxu0 0
        %2756 = vmatprep.subr.bf16.mxu0 0
        %2757 = vmatpush2.bf16.msra.mxu0 0
        %2758 = vmatprep.subr.bf16.mxu0 0
        %2759 = vmatpush2.bf16.msra.mxu0 0
        %2760 = vmatprep.subr.bf16.mxu0 0
        %2761 = vmatpush2.bf16.msra.mxu0 0
        %2762 = vmatprep.subr.bf16.mxu0 0
        %2763 = vmatpush2.bf16.msra.mxu0 0
        %2764 = vmatprep.subr.bf16.mxu0 0
        %2765 = vmatpush2.bf16.msra.mxu0 0
        %2766 = vmatprep.mubr.bf16.mxu0 0
        %2767 = vmatmul.mubr.bf16.gmra.mxu0 %v2708
        %v2768 = vpop.f32.mrf.mxu0
        %v2769 = vadd.f32 %v2704, %v2768
        %v2770 = vpop.f32.mrf.mxu0
        %v2771 = vpop.f32.mrf.mxu0
        %v2772 = vadd.f32 %v2704, %v2771
        %v2773 = vpop.f32.mrf.mxu0
        %2774 = vmatprep.mubr.bf16.mxu0 0
        %2775 = vmatmul.mubr.bf16.gmra.mxu0 %v2711
        %v2776 = vpop.f32.mrf.mxu0
        %v2777 = vadd.f32 %v2704, %v2776
        %v2778 = vpop.f32.mrf.mxu0
        %v2779 = vpop.f32.mrf.mxu0
        %v2780 = vadd.f32 %v2704, %v2779
        %v2781 = vpop.f32.mrf.mxu0
        %2782 = vmatprep.mubr.bf16.mxu0 0
        %2783 = vmatmul.mubr.bf16.gmra.mxu0 %v2714
        %v2784 = vpop.f32.mrf.mxu0
        %v2785 = vadd.f32 %v2704, %v2784
        %v2786 = vpop.f32.mrf.mxu0
        %v2787 = vpop.f32.mrf.mxu0
        %v2788 = vadd.f32 %v2704, %v2787
        %v2789 = vpop.f32.mrf.mxu0
        %2790 = vmatprep.mubr.bf16.mxu0 0
        %2791 = vmatmul.mubr.bf16.gmra.mxu0 %v2717
        %v2792 = vpop.f32.mrf.mxu0
        %v2793 = vadd.f32 %v2704, %v2792
        %v2794 = vpop.f32.mrf.mxu0
        %v2795 = vpop.f32.mrf.mxu0
        %v2796 = vadd.f32 %v2704, %v2795
        %v2797 = vpop.f32.mrf.mxu0
        %2798 = vmatprep.mubr.bf16.mxu0 0
        %2799 = vmatmul.mubr.bf16.gmra.mxu0 %v2720
        %v2800 = vpop.f32.mrf.mxu0
        %v2801 = vadd.f32 %v2704, %v2800
        %v2802 = vpop.f32.mrf.mxu0
        %v2803 = vpop.f32.mrf.mxu0
        %v2804 = vadd.f32 %v2704, %v2803
        %v2805 = vpop.f32.mrf.mxu0
        %2806 = vmatprep.mubr.bf16.mxu0 0
        %2807 = vmatmul.mubr.bf16.gmra.mxu0 %v2723
        %v2808 = vpop.f32.mrf.mxu0
        %v2809 = vadd.f32 %v2704, %v2808
        %v2810 = vpop.f32.mrf.mxu0
        %v2811 = vpop.f32.mrf.mxu0
        %v2812 = vadd.f32 %v2704, %v2811
        %v2813 = vpop.f32.mrf.mxu0
        %2814 = vmatprep.mubr.bf16.mxu0 0
        %2815 = vmatmul.mubr.bf16.gmra.mxu0 %v2726
        %v2816 = vpop.f32.mrf.mxu0
        %v2817 = vadd.f32 %v2704, %v2816
        %v2818 = vpop.f32.mrf.mxu0
        %v2819 = vpop.f32.mrf.mxu0
        %v2820 = vadd.f32 %v2704, %v2819
        %v2821 = vpop.f32.mrf.mxu0
        %2822 = vmatprep.mubr.bf16.mxu0 0
        %2823 = vmatmul.mubr.bf16.gmra.mxu0 %v2729
        %v2824 = vpop.f32.mrf.mxu0
        %v2825 = vadd.f32 %v2704, %v2824
        %v2826 = vpop.f32.mrf.mxu0
        %v2827 = vpop.f32.mrf.mxu0
        %v2828 = vadd.f32 %v2704, %v2827
        %v2829 = vpop.f32.mrf.mxu0
        %2830 = vdwg.mxu0
        %v2831 = vunpack.c.l.bf16 %v392
        %v2832 = vunpack.c.l.bf16 %v393
        %v2833 = vunpack.c.l.bf16 %v394
        %v2834 = vunpack.c.l.bf16 %v395
        %v2835 = vunpack.c.l.bf16 %v396
        %v2836 = vunpack.c.l.bf16 %v397
        %v2837 = vunpack.c.l.bf16 %v398
        %v2838 = vunpack.c.l.bf16 %v399
        %v2839 = vunpack.c.l.bf16 %v400
        %v2840 = vunpack.c.l.bf16 %v401
        %v2841 = vunpack.c.l.bf16 %v402
        %v2842 = vunpack.c.l.bf16 %v403
        %v2843 = vunpack.c.l.bf16 %v404
        %v2844 = vunpack.c.l.bf16 %v405
        %v2845 = vunpack.c.l.bf16 %v406
        %v2846 = vunpack.c.l.bf16 %v407
        %v2847 = vadd.f32 %v2769, %v2831
        %v2848 = vadd.f32 %v2772, %v2832
        %v2849 = vadd.f32 %v2777, %v2833
        %v2850 = vadd.f32 %v2780, %v2834
        %v2851 = vadd.f32 %v2785, %v2835
        %v2852 = vadd.f32 %v2788, %v2836
        %v2853 = vadd.f32 %v2793, %v2837
        %v2854 = vadd.f32 %v2796, %v2838
        %v2855 = vadd.f32 %v2801, %v2839
        %v2856 = vadd.f32 %v2804, %v2840
        %v2857 = vadd.f32 %v2809, %v2841
        %v2858 = vadd.f32 %v2812, %v2842
        %v2859 = vadd.f32 %v2817, %v2843
        %v2860 = vadd.f32 %v2820, %v2844
        %v2861 = vadd.f32 %v2825, %v2845
        %v2862 = vadd.f32 %v2828, %v2846
        %v2863 = vmax.f32 %v2847, 0.0
        %v2864 = vmax.f32 %v2848, 0.0
        %v2865 = vmax.f32 %v2849, 0.0
        %v2866 = vmax.f32 %v2850, 0.0
        %v2867 = vmax.f32 %v2851, 0.0
        %v2868 = vmax.f32 %v2852, 0.0
        %v2869 = vmax.f32 %v2853, 0.0
        %v2870 = vmax.f32 %v2854, 0.0
        %v2871 = vmax.f32 %v2855, 0.0
        %v2872 = vmax.f32 %v2856, 0.0
        %v2873 = vmax.f32 %v2857, 0.0
        %v2874 = vmax.f32 %v2858, 0.0
        %v2875 = vmax.f32 %v2859, 0.0
        %v2876 = vmax.f32 %v2860, 0.0
        %v2877 = vmax.f32 %v2861, 0.0
        %v2878 = vmax.f32 %v2862, 0.0
        %v2879 = vpack.c.bf16 %v2864, %v2863
        %v2880 = vpack.c.bf16 %v2866, %v2865
        %v2881 = vpack.c.bf16 %v2868, %v2867
        %v2882 = vpack.c.bf16 %v2870, %v2869
        %v2883 = vpack.c.bf16 %v2872, %v2871
        %v2884 = vpack.c.bf16 %v2874, %v2873
        %v2885 = vpack.c.bf16 %v2876, %v2875
        %v2886 = vpack.c.bf16 %v2878, %v2877
        %v2895 = vunpack.c.l.b16 %v2879
        %v2896 = vunpack.c.h.b16 %v2879
        %v2897 = vunpack.c.l.b16 %v2880
        %v2898 = vunpack.c.h.b16 %v2880
        %v2899 = vunpack.c.l.b16 %v2881
        %v2900 = vunpack.c.h.b16 %v2881
        %v2901 = vunpack.c.l.b16 %v2882
        %v2902 = vunpack.c.h.b16 %v2882
        %v2903 = vunpack.c.l.b16 %v2883
        %v2904 = vunpack.c.h.b16 %v2883
        %v2905 = vunpack.c.l.b16 %v2884
        %v2906 = vunpack.c.h.b16 %v2884
        %v2907 = vunpack.c.l.b16 %v2885
        %v2908 = vunpack.c.h.b16 %v2885
        %v2909 = vunpack.c.l.b16 %v2886
        %v2910 = vunpack.c.h.b16 %v2886
        %v2911 = vpack.c.b16 %v2895, %v2895
        %v2912 = vpack.c.b16 %v2896, %v2896
        %v2913 = vpack.c.b16 %v2897, %v2897
        %v2914 = vpack.c.b16 %v2898, %v2898
        %v2915 = vpack.c.b16 %v2899, %v2899
        %v2916 = vpack.c.b16 %v2900, %v2900
        %v2917 = vpack.c.b16 %v2901, %v2901
        %v2918 = vpack.c.b16 %v2902, %v2902
        %v2919 = vpack.c.b16 %v2903, %v2903
        %v2920 = vpack.c.b16 %v2904, %v2904
        %v2921 = vpack.c.b16 %v2905, %v2905
        %v2922 = vpack.c.b16 %v2906, %v2906
        %v2923 = vpack.c.b16 %v2907, %v2907
        %v2924 = vpack.c.b16 %v2908, %v2908
        %v2925 = vpack.c.b16 %v2909, %v2909
        %v2926 = vpack.c.b16 %v2910, %v2910
        %vm2943 = vcmask 125952
        %2944 = vst.msk [vmem:[%s387] sm:$0xf] %vm2943, %v2911
        %2945 = vst.msk [vmem:[%s387 + $0x4] sm:$0xf] %vm2943, %v2912
        %2946 = vst.msk [vmem:[%s387 + $0x8] sm:$0xf] %vm2943, %v2913
        %2947 = vst.msk [vmem:[%s387 + $0xc] sm:$0xf] %vm2943, %v2914
        %2948 = vst.msk [vmem:[%s387 + $0x10] sm:$0xf] %vm2943, %v2915
        %2949 = vst.msk [vmem:[%s387 + $0x14] sm:$0xf] %vm2943, %v2916
        %2950 = vst.msk [vmem:[%s387 + $0x18] sm:$0xf] %vm2943, %v2917
        %2951 = vst.msk [vmem:[%s387 + $0x1c] sm:$0xf] %vm2943, %v2918
        %2952 = vst.msk [vmem:[%s387 + $0x20] sm:$0xf] %vm2943, %v2919
        %2953 = vst.msk [vmem:[%s387 + $0x24] sm:$0xf] %vm2943, %v2920
        %2954 = vst.msk [vmem:[%s387 + $0x28] sm:$0xf] %vm2943, %v2921
        %2955 = vst.msk [vmem:[%s387 + $0x2c] sm:$0xf] %vm2943, %v2922
        %2956 = vst.msk [vmem:[%s387 + $0x30] sm:$0xf] %vm2943, %v2923
        %2957 = vst.msk [vmem:[%s387 + $0x34] sm:$0xf] %vm2943, %v2924
        %2958 = vst.msk [vmem:[%s387 + $0x38] sm:$0xf] %vm2943, %v2925
        %2959 = vst.msk [vmem:[%s387 + $0x3c] sm:$0xf] %vm2943, %v2926
        %s2960 = sand.u32 %s232, 1
        %s2961 = scalar_lea.sflag [#allocation6], %s2960
        %s2962 = sand.u32 %s232, 1
        %s2963 = smul.addr %s2962, 64
        %s2964 = scalar_lea.vmem [#allocation9], %s2963
        // Predicated region
        $region69: #{tpu_custom_call.1} parent=51 // pred_check
          %p2965 = pneg %p242
        $region70: #{tpu_custom_call.1} parent=51 // pred_check_branch
          %2967 = sbr.rel (%p2965) target = $region72
        $region71: #{tpu_custom_call.1} parent=51 // pred_region
          %s2968 = smul.u32 8, %s33
          %s2970 = ssub.s32 1024, 1024
          %2971 = vsyncadd %s2961, %s2970
          %s2972 = smul.addr %s2968, 2
          %s2973 = smul.addr %s32, 32
          %s2974 = sadd.s32 %s2972, %s2973
          %s2975 = smul.addr %s2974, 64
          %s2976 = scalar_lea.hbm %s8, %s2975
          %s2977 = sshll.u32 %s2964, 4
          %s2978 = int_to_ptr.vmem [resolvable:$true] %s2977
          %2983 = dma.vmem_to_hbm [thread:$0]  %s2978, 1024, %s2976, %s2961, 64, 64, 4
        $region72: #{tpu_custom_call.1} parent=51 // pred_fallthru
          _
      $region52: #{tpu_custom_call.1} parent=5 // pred_fallthru
        _
      %p2984 = scmp.le.s32.totalorder 2, %s23
      // Predicated region
      $region73: #{tpu_custom_call.1} parent=5 // pred_check
        %p2985 = pneg %p2984
      $region74: #{tpu_custom_call.1} parent=5 // pred_check_branch
        %2987 = sbr.rel (%p2985) target = $region76
      $region75: #{tpu_custom_call.1} parent=5 // pred_region
        %s2988 = ssub.s32 %s23, 2
        // Predicated region
        $region77: #{tpu_custom_call.1} parent=75 // pred_check
          %p2989 = pneg %p248
        $region78: #{tpu_custom_call.1} parent=75 // pred_check_branch
          %2991 = sbr.rel (%p2989) target = $region80
        $region79: #{tpu_custom_call.1} parent=75 // pred_region
          %s2992 = sand.u32 %s233, 1
          %s2993 = scalar_lea.sflag [#allocation6], %s2992
          %s2994 = sand.u32 %s233, 1
          %s2995 = smul.addr %s2994, 64
          %s2996 = scalar_lea.vmem [#allocation9], %s2995
          %2997 = dma.done %s2993, 1024
        $region80: #{tpu_custom_call.1} parent=75 // pred_fallthru
          _
      $region76: #{tpu_custom_call.1} parent=5 // pred_fallthru
        _
    $region6: #{tpu_custom_call.1} parent=1 // loop_footer
      %s27 = sadd.s32 1, %s23
    $region7: #{tpu_custom_call.1} parent=1 // loop_footer_branch
      %22 = sbr.rel target = $region3
    $region8: #{tpu_custom_call.1} parent=1 // loop_exit
      _
    %2998 = vsyncpa [#allocation5], 1
    %s2999 = scalar_lea.sflag [#allocation5], 1
    %3000 = vsyncpa %s2999, 1
    %3001 = vsyncpa [#allocation8], 1
    %s3002 = scalar_lea.sflag [#allocation8], 1
    %3003 = vsyncpa %s3002, 1
    %3004 = vsyncpa [#allocation6], 1
    %s3005 = scalar_lea.sflag [#allocation6], 1
    %3006 = vsyncpa %s3005, 1

</llo_original>
